<compile_context>
chip_gen: v5e
topology: v5e:2x2
jax: 0.10.0
libtpu: 0.0.40
codegen_flags: <defaults>
</compile_context>

<pallas_src>
import math
import jax
import jax.numpy as jnp
from jax.experimental import pallas as pl
from jax.experimental.pallas import tpu as pltpu

# ----------------------------- config (small) ------------------------------
B, S, H = 2, 8, 32            # batch, seq, hidden
NUM_HEADS, HEAD_DIM = 4, 8    # H = NUM_HEADS * HEAD_DIM
INTER = 64                    # intermediate (FFN) size
NUM_LAYERS = 2                # config.num_hidden_layers
LN_EPS = 1e-12                # BertLayerNorm eps
OUTPUT_HIDDEN_STATES = False  # config.output_hidden_states
OUTPUT_ATTENTIONS = False     # config.output_attentions


# --------------------------- fused encoder kernel ---------------------------
def make_encoder_kernel(mix_layer, has_stream2):
    """Whole BertEncoder4Mix forward in one kernel.

    mix_layer / has_stream2 are Python-static, so the layer/mix schedule is
    unrolled at trace time exactly like the PyTorch control flow.
    """
    scale = 1.0 / math.sqrt(HEAD_DIM)

    def kernel(*refs):
        if has_stream2:
            x1_ref, x2_ref, l_ref, m1_ref, m2_ref = refs[:5]
            w_refs = refs[5:-1]
        else:
            x1_ref, m1_ref = refs[:2]
            w_refs = refs[2:-1]
        out_ref = refs[-1]
        (wqkv_ref, bqkv_ref, wao_ref, bao_ref, g1_ref, b1_ref,
         wi_ref, bi_ref, wo_ref, bo_ref, g2_ref, b2_ref) = w_refs

        def layer_norm(x, gamma, beta):
            mean = jnp.mean(x, axis=-1, keepdims=True)
            var = jnp.mean((x - mean) ** 2, axis=-1, keepdims=True)
            return (x - mean) * jax.lax.rsqrt(var + LN_EPS) * gamma + beta

        def gelu(x):
            # TODO(synk): transformers BERT uses exact erf-GELU; EUP-friendly
            # tanh approximation used here (numerically very close).
            c = math.sqrt(2.0 / math.pi)
            return 0.5 * x * (1.0 + jnp.tanh(c * (x + 0.044715 * x * x * x)))

        def bert_layer(li, x, mask, nb):
            # x: (nb*S, H) f32 activations; mask: (nb, 1, S) additive mask.
            # Fused QKV projection (bf16 MXU operands, f32 accumulation).
            qkv = jnp.dot(x.astype(jnp.bfloat16), wqkv_ref[li],
                          preferred_element_type=jnp.float32) + bqkv_ref[li]
            q3 = qkv[:, 0 * H:1 * H].reshape(nb, S, H)
            k3 = qkv[:, 1 * H:2 * H].reshape(nb, S, H)
            v3 = qkv[:, 2 * H:3 * H].reshape(nb, S, H)

            def to_heads(t):
                # (nb, S, NUM_HEADS*D) -> head-major (NUM_HEADS*nb, S, D)
                return jnp.concatenate(
                    [t[:, :, hd * HEAD_DIM:(hd + 1) * HEAD_DIM]
                     for hd in range(NUM_HEADS)], axis=0)

            qh = (to_heads(q3) * scale).astype(jnp.bfloat16)   # scale folded once
            kh = to_heads(k3).astype(jnp.bfloat16)
            vh = to_heads(v3).astype(jnp.bfloat16)
            maskh = jnp.concatenate([mask] * NUM_HEADS, axis=0)  # (NH*nb, 1, S)

            # One batched score/softmax/context over b = NUM_HEADS * nb.
            s = jnp.einsum('bqd,bkd->bqk', qh, kh,
                           preferred_element_type=jnp.float32)
            s = s + maskh                                  # additive mask
            s = s - jnp.max(s, axis=-1, keepdims=True)     # stable softmax
            p = jnp.exp(s)
            p = p * pl.reciprocal(jnp.sum(p, axis=-1, keepdims=True),
                                  approx=True)
            ctx = jnp.einsum('bqk,bkd->bqd', p.astype(jnp.bfloat16), vh,
                             preferred_element_type=jnp.float32)  # (NH*nb,S,D)

            # head-major (NH*nb, S, D) -> (nb*S, H)
            ctx = jnp.concatenate(
                [ctx[hd * nb:(hd + 1) * nb] for hd in range(NUM_HEADS)],
                axis=-1).reshape(nb * S, H)

            attn = jnp.dot(ctx.astype(jnp.bfloat16), wao_ref[li],
                           preferred_element_type=jnp.float32) + bao_ref[li]
            h = layer_norm(attn + x, g1_ref[li], b1_ref[li])

            inter = gelu(jnp.dot(h.astype(jnp.bfloat16), wi_ref[li],
                                 preferred_element_type=jnp.float32)
                         + bi_ref[li])
            ffn = jnp.dot(inter.astype(jnp.bfloat16), wo_ref[li],
                          preferred_element_type=jnp.float32) + bo_ref[li]
            return layer_norm(ffn + h, g2_ref[li], b2_ref[li])

        def mix(ha, hb):
            # TODO(synk): PyTorch's mix_layer==-1 path uses raw `l` (no
            # unsqueeze); a (B,1,1)-shaped l is used for both paths here.
            lam = l_ref[...]                      # (B, 1, 1)
            ha3, hb3 = ha.reshape(B, S, H), hb.reshape(B, S, H)
            return (lam * ha3 + (1.0 - lam) * hb3).reshape(B * S, H)

        h1 = x1_ref[...]                          # (B*S, H)
        m1 = m1_ref[...]                          # (B, 1, S)
        if has_stream2:
            h2 = x2_ref[...]
            m2 = m2_ref[...]

        if has_stream2 and mix_layer == -1:
            h1 = mix(h1, h2)

        # Pre-mix segment: run BOTH streams as one row-concatenated batch.
        concat_active = has_stream2 and mix_layer >= 0
        if concat_active:
            hcat = jnp.concatenate([h1, h2], axis=0)      # (2*B*S, H)
            mcat = jnp.concatenate([m1, m2], axis=0)      # (2B, 1, S)

        for i in range(NUM_LAYERS):
            if i <= mix_layer:
                if concat_active:
                    hcat = bert_layer(i, hcat, mcat, 2 * B)
                else:
                    h1 = bert_layer(i, h1, m1, B)
            if i == mix_layer and has_stream2:
                h1 = mix(hcat[:B * S, :], hcat[B * S:, :])
                concat_active = False
            if i > mix_layer:
                h1 = bert_layer(i, h1, m1, B)

        if concat_active:
            # mix_layer >= NUM_LAYERS: mix never ran; stream2 result discarded
            # (matches the PyTorch semantics of only returning hidden_states).
            h1 = hcat[:B * S, :]

        # TODO(synk): final store is H=32 lanes (<128, masked vst); at this
        # 2 KB output a lane-dense repack would cost more than it saves.
        # TODO(synk): on v7x the independent pre-mix streams could go to the
        # second TensorCore, but per-step overhead dominates at B=2,S=8.
        out_ref[...] = h1.astype(out_ref.dtype)

    return kernel


# --------------------------- BertEncoder4Mix forward -------------------------
def _prep_mask(mask):
    if mask is None:
        return jnp.zeros((B, 1, S), jnp.float32)
    mask = jnp.asarray(mask, jnp.float32)
    if mask.ndim == 4:  # transformers get_extended_attention_mask: [B,1,1,S]
        mask = mask.reshape(mask.shape[0], 1, mask.shape[-1])
    return mask


def _layer_cost(nb):
    rows = nb * S
    mm = (2 * rows * H * (3 * H) + 2 * rows * H * H
          + 2 * rows * H * INTER + 2 * rows * INTER * H)
    attn = 4 * nb * NUM_HEADS * S * S * HEAD_DIM
    transc = nb * NUM_HEADS * S * S + rows * INTER + 2 * rows  # exp+tanh+rsqrt
    return mm + attn, transc


def bert_encoder4mix(stacked_params, hidden_states, hidden_states2=None, l=None,
                     mix_layer=1000, attention_mask=None, attention_mask2=None,
                     head_mask=None):
    """Forward pass of BertEncoder4Mix as ONE fused pallas_call."""
    assert head_mask is None or all(hm is None for hm in head_mask), \
        "TODO(synk): non-None per-layer head_mask is not supported"
    has2 = hidden_states2 is not None

    m1 = _prep_mask(attention_mask)
    args = [hidden_states.astype(jnp.float32).reshape(B * S, H)]
    if has2:
        args += [hidden_states2.astype(jnp.float32).reshape(B * S, H),
                 jnp.asarray(l, jnp.float32).reshape(B, 1, 1),
                 m1, _prep_mask(attention_mask2)]
    else:
        args += [m1]
    args += list(stacked_params)

    flops = transc = 0
    for i in range(NUM_LAYERS):
        nb = 2 * B if (has2 and i <= mix_layer) else B
        f, t = _layer_cost(nb)
        flops += f
        transc += t
    bytes_accessed = (sum(int(a.size) * a.dtype.itemsize for a in args)
                      + B * S * H * 4)

    vmem_spec = pl.BlockSpec(memory_space=pltpu.MemorySpace.VMEM)
    out = pl.pallas_call(
        make_encoder_kernel(mix_layer, has2),
        out_shape=jax.ShapeDtypeStruct((B * S, H), jnp.float32),
        in_specs=[vmem_spec] * len(args),
        out_specs=vmem_spec,
        cost_estimate=pl.CostEstimate(flops=int(flops),
                                      transcendentals=int(transc),
                                      bytes_accessed=int(bytes_accessed)),
    )(*args)

    outputs = (out.reshape(B, S, H),)
    # TODO(synk): output_hidden_states / output_attentions would need extra
    # per-layer outputs from the fused kernel; both config flags are False.
    return outputs


# ------------------------- parameter initialization -------------------------
def init_stacked_params(key):
    """Layer-stacked weights (leading axis = layer). QKV fused to (H, 3H).
    Matmul weights stored in bf16 (MXU operands); biases / LN params in f32."""
    std = 0.02

    def w(k, shape):
        return jax.random.normal(k, shape, jnp.float32) * std

    wqkv_l, wao_l, wi_l, wo_l = [], [], [], []
    for i in range(NUM_LAYERS):
        ks = jax.random.split(jax.random.fold_in(key, i), 6)
        wq, wk, wv = w(ks[0], (H, H)), w(ks[1], (H, H)), w(ks[2], (H, H))
        wqkv_l.append(jnp.concatenate([wq, wk, wv], axis=1))   # (H, 3H) fused
        wao_l.append(w(ks[3], (H, H)))
        wi_l.append(w(ks[4], (H, INTER)))
        wo_l.append(w(ks[5], (INTER, H)))

    L = NUM_LAYERS
    bf = jnp.bfloat16
    zeros_h = jnp.zeros((L, 1, H), jnp.float32)
    ones_h = jnp.ones((L, 1, H), jnp.float32)
    return (
        jnp.stack(wqkv_l).astype(bf), jnp.zeros((L, 1, 3 * H), jnp.float32),  # QKV
        jnp.stack(wao_l).astype(bf), zeros_h,                                 # attn out
        ones_h, zeros_h,                                                      # LN1
        jnp.stack(wi_l).astype(bf), jnp.zeros((L, 1, INTER), jnp.float32),    # FFN in
        jnp.stack(wo_l).astype(bf), zeros_h,                                  # FFN out
        ones_h, zeros_h,                                                      # LN2
    )


# ----------------------------------- main ------------------------------------
if __name__ == "__main__":
    key = jax.random.PRNGKey(0)
    k_p, k_x1, k_x2, k_l = jax.random.split(key, 4)

    params = init_stacked_params(k_p)

    hidden_states = jax.random.normal(k_x1, (B, S, H), jnp.float32)
    hidden_states2 = jax.random.normal(k_x2, (B, S, H), jnp.float32)
    l = jax.random.uniform(k_l, (B,), jnp.float32)        # per-example mix coeff

    # binary masks (all tokens valid) -> extended additive masks [B,1,1,S]
    binary_mask = jnp.ones((B, S), jnp.float32)
    ext_mask = ((1.0 - binary_mask) * -10000.0)[:, None, None, :]
    ext_mask2 = ext_mask

    # Mix after layer 0: layer 0 runs on both (row-concatenated) streams,
    # mix, layer 1 on the mixed stream.
    out = bert_encoder4mix(params, hidden_states, hidden_states2, l,
                           mix_layer=0,
                           attention_mask=ext_mask, attention_mask2=ext_mask2,
                           head_mask=[None] * NUM_LAYERS)

    # Also exercise the mix_layer == -1 path and the no-mix path.
    out_pre = bert_encoder4mix(params, hidden_states, hidden_states2, l,
                               mix_layer=-1,
                               attention_mask=ext_mask, attention_mask2=ext_mask2,
                               head_mask=[None] * NUM_LAYERS)
    out_plain = bert_encoder4mix(params, hidden_states, None, None,
                                 mix_layer=1000,
                                 attention_mask=ext_mask,
                                 head_mask=[None] * NUM_LAYERS)

    h = jax.block_until_ready(out[0])
    jax.block_until_ready(out_pre[0])
    jax.block_until_ready(out_plain[0])
    assert h.shape == (B, S, H) and bool(jnp.all(jnp.isfinite(h)))
    print("KERNEL_OK")
</pallas_src>

<mosaic_0001>
module attributes {stable_mosaic.version = 11 : i64} {
  func.func @kernel(%arg0: memref<16x32xf32, #tpu.memory_space<vmem>>, %arg1: memref<16x32xf32, #tpu.memory_space<vmem>>, %arg2: memref<2x1x1xf32, #tpu.memory_space<vmem>>, %arg3: memref<2x1x8xf32, #tpu.memory_space<vmem>>, %arg4: memref<2x1x8xf32, #tpu.memory_space<vmem>>, %arg5: memref<2x32x96xbf16, #tpu.memory_space<vmem>>, %arg6: memref<2x1x96xf32, #tpu.memory_space<vmem>>, %arg7: memref<2x32x32xbf16, #tpu.memory_space<vmem>>, %arg8: memref<2x1x32xf32, #tpu.memory_space<vmem>>, %arg9: memref<2x1x32xf32, #tpu.memory_space<vmem>>, %arg10: memref<2x1x32xf32, #tpu.memory_space<vmem>>, %arg11: memref<2x32x64xbf16, #tpu.memory_space<vmem>>, %arg12: memref<2x1x64xf32, #tpu.memory_space<vmem>>, %arg13: memref<2x64x32xbf16, #tpu.memory_space<vmem>>, %arg14: memref<2x1x32xf32, #tpu.memory_space<vmem>>, %arg15: memref<2x1x32xf32, #tpu.memory_space<vmem>>, %arg16: memref<2x1x32xf32, #tpu.memory_space<vmem>>, %arg17: memref<16x32xf32, #tpu.memory_space<vmem>>) attributes {dimension_semantics = [], scalar_prefetch = 0 : i64, scratch_operands = 0 : i64, tpu.core_type = #tpu.core_type<tc>} {
    %c0 = arith.constant 0 : index
    %c0_0 = arith.constant 0 : index
    %0 = vector.load %arg0[%c0, %c0_0] : memref<16x32xf32, #tpu.memory_space<vmem>>, vector<16x32xf32>
    %c0_1 = arith.constant 0 : index
    %c0_2 = arith.constant 0 : index
    %c0_3 = arith.constant 0 : index
    %1 = vector.load %arg3[%c0_1, %c0_2, %c0_3] : memref<2x1x8xf32, #tpu.memory_space<vmem>>, vector<2x1x8xf32>
    %c0_4 = arith.constant 0 : index
    %c0_5 = arith.constant 0 : index
    %2 = vector.load %arg1[%c0_4, %c0_5] : memref<16x32xf32, #tpu.memory_space<vmem>>, vector<16x32xf32>
    %c0_6 = arith.constant 0 : index
    %c0_7 = arith.constant 0 : index
    %c0_8 = arith.constant 0 : index
    %3 = vector.load %arg4[%c0_6, %c0_7, %c0_8] : memref<2x1x8xf32, #tpu.memory_space<vmem>>, vector<2x1x8xf32>
    %4 = tpu.concatenate %0, %2 in 0 : vector<16x32xf32>, vector<16x32xf32> -> vector<32x32xf32>
    %5 = tpu.concatenate %1, %3 in 0 : vector<2x1x8xf32>, vector<2x1x8xf32> -> vector<4x1x8xf32>
    %6 = arith.truncf %4 : vector<32x32xf32> to vector<32x32xbf16>
    %c0_9 = arith.constant 0 : index
    %c0_10 = arith.constant 0 : index
    %c0_11 = arith.constant 0 : index
    %7 = vector.load %arg5[%c0_9, %c0_10, %c0_11] : memref<2x32x96xbf16, #tpu.memory_space<vmem>>, vector<1x32x96xbf16>
    %8 = vector.shape_cast %7 : vector<1x32x96xbf16> to vector<32x96xbf16>
    %cst = arith.constant dense<0.000000e+00> : vector<32x96xf32>
    %9 = tpu.matmul %6, %8, %cst {dimension_numbers = #tpu.dot_dimension_numbers<[1], [0], [0], [1], [0, 0, 1, 1], [], []>} : vector<32x32xbf16>, vector<32x96xbf16>, vector<32x96xf32> -> vector<32x96xf32>
    %c0_12 = arith.constant 0 : index
    %c0_13 = arith.constant 0 : index
    %c0_14 = arith.constant 0 : index
    %10 = vector.load %arg6[%c0_12, %c0_13, %c0_14] : memref<2x1x96xf32, #tpu.memory_space<vmem>>, vector<1x1x96xf32>
    %11 = vector.shape_cast %10 : vector<1x1x96xf32> to vector<1x96xf32>
    %12 = vector.broadcast %11 : vector<1x96xf32> to vector<32x96xf32>
    %13 = arith.addf %9, %12 : vector<32x96xf32>
    %14 = vector.extract_strided_slice %13 {offsets = [0, 0], sizes = [32, 32], strides = [1, 1]} : vector<32x96xf32> to vector<32x32xf32>
    %15 = vector.shape_cast %14 : vector<32x32xf32> to vector<4x8x32xf32>
    %16 = vector.extract_strided_slice %13 {offsets = [0, 32], sizes = [32, 32], strides = [1, 1]} : vector<32x96xf32> to vector<32x32xf32>
    %17 = vector.shape_cast %16 : vector<32x32xf32> to vector<4x8x32xf32>
    %18 = vector.extract_strided_slice %13 {offsets = [0, 64], sizes = [32, 32], strides = [1, 1]} : vector<32x96xf32> to vector<32x32xf32>
    %19 = vector.shape_cast %18 : vector<32x32xf32> to vector<4x8x32xf32>
    %20 = vector.extract_strided_slice %15 {offsets = [0, 0, 0], sizes = [4, 8, 8], strides = [1, 1, 1]} : vector<4x8x32xf32> to vector<4x8x8xf32>
    %21 = vector.extract_strided_slice %15 {offsets = [0, 0, 8], sizes = [4, 8, 8], strides = [1, 1, 1]} : vector<4x8x32xf32> to vector<4x8x8xf32>
    %22 = vector.extract_strided_slice %15 {offsets = [0, 0, 16], sizes = [4, 8, 8], strides = [1, 1, 1]} : vector<4x8x32xf32> to vector<4x8x8xf32>
    %23 = vector.extract_strided_slice %15 {offsets = [0, 0, 24], sizes = [4, 8, 8], strides = [1, 1, 1]} : vector<4x8x32xf32> to vector<4x8x8xf32>
    %24 = tpu.concatenate %20, %21, %22, %23 in 0 : vector<4x8x8xf32>, vector<4x8x8xf32>, vector<4x8x8xf32>, vector<4x8x8xf32> -> vector<16x8x8xf32>
    %cst_15 = arith.constant 0.353553385 : f32
    %25 = vector.broadcast %cst_15 : f32 to vector<16x8x8xf32>
    %26 = arith.mulf %24, %25 : vector<16x8x8xf32>
    %27 = arith.truncf %26 : vector<16x8x8xf32> to vector<16x8x8xbf16>
    %28 = vector.extract_strided_slice %17 {offsets = [0, 0, 0], sizes = [4, 8, 8], strides = [1, 1, 1]} : vector<4x8x32xf32> to vector<4x8x8xf32>
    %29 = vector.extract_strided_slice %17 {offsets = [0, 0, 8], sizes = [4, 8, 8], strides = [1, 1, 1]} : vector<4x8x32xf32> to vector<4x8x8xf32>
    %30 = vector.extract_strided_slice %17 {offsets = [0, 0, 16], sizes = [4, 8, 8], strides = [1, 1, 1]} : vector<4x8x32xf32> to vector<4x8x8xf32>
    %31 = vector.extract_strided_slice %17 {offsets = [0, 0, 24], sizes = [4, 8, 8], strides = [1, 1, 1]} : vector<4x8x32xf32> to vector<4x8x8xf32>
    %32 = tpu.concatenate %28, %29, %30, %31 in 0 : vector<4x8x8xf32>, vector<4x8x8xf32>, vector<4x8x8xf32>, vector<4x8x8xf32> -> vector<16x8x8xf32>
    %33 = arith.truncf %32 : vector<16x8x8xf32> to vector<16x8x8xbf16>
    %34 = vector.extract_strided_slice %19 {offsets = [0, 0, 0], sizes = [4, 8, 8], strides = [1, 1, 1]} : vector<4x8x32xf32> to vector<4x8x8xf32>
    %35 = vector.extract_strided_slice %19 {offsets = [0, 0, 8], sizes = [4, 8, 8], strides = [1, 1, 1]} : vector<4x8x32xf32> to vector<4x8x8xf32>
    %36 = vector.extract_strided_slice %19 {offsets = [0, 0, 16], sizes = [4, 8, 8], strides = [1, 1, 1]} : vector<4x8x32xf32> to vector<4x8x8xf32>
    %37 = vector.extract_strided_slice %19 {offsets = [0, 0, 24], sizes = [4, 8, 8], strides = [1, 1, 1]} : vector<4x8x32xf32> to vector<4x8x8xf32>
    %38 = tpu.concatenate %34, %35, %36, %37 in 0 : vector<4x8x8xf32>, vector<4x8x8xf32>, vector<4x8x8xf32>, vector<4x8x8xf32> -> vector<16x8x8xf32>
    %39 = arith.truncf %38 : vector<16x8x8xf32> to vector<16x8x8xbf16>
    %40 = tpu.concatenate %5, %5, %5, %5 in 0 : vector<4x1x8xf32>, vector<4x1x8xf32>, vector<4x1x8xf32>, vector<4x1x8xf32> -> vector<16x1x8xf32>
    "tpu.trace_start"() <{level = 10 : i32, message = "bqd,bkd->bqk"}> : () -> ()
    %cst_16 = arith.constant dense<0.000000e+00> : vector<16x8x8xf32>
    %41 = tpu.matmul %27, %33, %cst_16 {dimension_numbers = #tpu.dot_dimension_numbers<[2], [2], [1], [1], [0, 0, 0, 1, 1, 1], [0], [0]>} : vector<16x8x8xbf16>, vector<16x8x8xbf16>, vector<16x8x8xf32> -> vector<16x8x8xf32>
    "tpu.trace_stop"() : () -> ()
    %42 = vector.broadcast %40 : vector<16x1x8xf32> to vector<16x8x8xf32>
    %43 = arith.addf %41, %42 : vector<16x8x8xf32>
    %cst_17 = arith.constant dense<0xFF800000> : vector<16x8xf32>
    %44 = vector.multi_reduction <maximumf>, %43, %cst_17 [2] : vector<16x8x8xf32> to vector<16x8xf32>
    %45 = vector.shape_cast %44 : vector<16x8xf32> to vector<16x8x1xf32>
    %46 = vector.broadcast %45 : vector<16x8x1xf32> to vector<16x8x8xf32>
    %47 = arith.subf %43, %46 : vector<16x8x8xf32>
    %48 = math.exp %47 : vector<16x8x8xf32>
    %cst_18 = arith.constant dense<0.000000e+00> : vector<16x8xf32>
    %49 = vector.multi_reduction <add>, %48, %cst_18 [2] : vector<16x8x8xf32> to vector<16x8xf32>
    %50 = vector.shape_cast %49 : vector<16x8xf32> to vector<16x8x1xf32>
    %51 = tpu.reciprocal %50 {approx = true} : vector<16x8x1xf32> -> vector<16x8x1xf32>
    %52 = vector.broadcast %51 : vector<16x8x1xf32> to vector<16x8x8xf32>
    %53 = arith.mulf %48, %52 : vector<16x8x8xf32>
    %54 = arith.truncf %53 : vector<16x8x8xf32> to vector<16x8x8xbf16>
    "tpu.trace_start"() <{level = 10 : i32, message = "bqk,bkd->bqd"}> : () -> ()
    %cst_19 = arith.constant dense<0.000000e+00> : vector<16x8x8xf32>
    %55 = tpu.matmul %54, %39, %cst_19 {dimension_numbers = #tpu.dot_dimension_numbers<[2], [1], [1], [2], [0, 0, 0, 1, 1, 2], [0], [0]>} : vector<16x8x8xbf16>, vector<16x8x8xbf16>, vector<16x8x8xf32> -> vector<16x8x8xf32>
    "tpu.trace_stop"() : () -> ()
    %56 = vector.extract_strided_slice %55 {offsets = [0, 0, 0], sizes = [4, 8, 8], strides = [1, 1, 1]} : vector<16x8x8xf32> to vector<4x8x8xf32>
    %57 = vector.extract_strided_slice %55 {offsets = [4, 0, 0], sizes = [4, 8, 8], strides = [1, 1, 1]} : vector<16x8x8xf32> to vector<4x8x8xf32>
    %58 = vector.extract_strided_slice %55 {offsets = [8, 0, 0], sizes = [4, 8, 8], strides = [1, 1, 1]} : vector<16x8x8xf32> to vector<4x8x8xf32>
    %59 = vector.extract_strided_slice %55 {offsets = [12, 0, 0], sizes = [4, 8, 8], strides = [1, 1, 1]} : vector<16x8x8xf32> to vector<4x8x8xf32>
    %60 = tpu.concatenate %56, %57, %58, %59 in 2 : vector<4x8x8xf32>, vector<4x8x8xf32>, vector<4x8x8xf32>, vector<4x8x8xf32> -> vector<4x8x32xf32>
    %61 = vector.shape_cast %60 : vector<4x8x32xf32> to vector<32x32xf32>
    %62 = arith.truncf %61 : vector<32x32xf32> to vector<32x32xbf16>
    %c0_20 = arith.constant 0 : index
    %c0_21 = arith.constant 0 : index
    %c0_22 = arith.constant 0 : index
    %63 = vector.load %arg7[%c0_20, %c0_21, %c0_22] : memref<2x32x32xbf16, #tpu.memory_space<vmem>>, vector<1x32x32xbf16>
    %64 = vector.shape_cast %63 : vector<1x32x32xbf16> to vector<32x32xbf16>
    %cst_23 = arith.constant dense<0.000000e+00> : vector<32x32xf32>
    %65 = tpu.matmul %62, %64, %cst_23 {dimension_numbers = #tpu.dot_dimension_numbers<[1], [0], [0], [1], [0, 0, 1, 1], [], []>} : vector<32x32xbf16>, vector<32x32xbf16>, vector<32x32xf32> -> vector<32x32xf32>
    %c0_24 = arith.constant 0 : index
    %c0_25 = arith.constant 0 : index
    %c0_26 = arith.constant 0 : index
    %66 = vector.load %arg8[%c0_24, %c0_25, %c0_26] : memref<2x1x32xf32, #tpu.memory_space<vmem>>, vector<1x1x32xf32>
    %67 = vector.shape_cast %66 : vector<1x1x32xf32> to vector<1x32xf32>
    %68 = vector.broadcast %67 : vector<1x32xf32> to vector<32x32xf32>
    %69 = arith.addf %65, %68 : vector<32x32xf32>
    %70 = arith.addf %69, %4 : vector<32x32xf32>
    %c0_27 = arith.constant 0 : index
    %c0_28 = arith.constant 0 : index
    %c0_29 = arith.constant 0 : index
    %71 = vector.load %arg9[%c0_27, %c0_28, %c0_29] : memref<2x1x32xf32, #tpu.memory_space<vmem>>, vector<1x1x32xf32>
    %72 = vector.shape_cast %71 : vector<1x1x32xf32> to vector<1x32xf32>
    %c0_30 = arith.constant 0 : index
    %c0_31 = arith.constant 0 : index
    %c0_32 = arith.constant 0 : index
    %73 = vector.load %arg10[%c0_30, %c0_31, %c0_32] : memref<2x1x32xf32, #tpu.memory_space<vmem>>, vector<1x1x32xf32>
    %74 = vector.shape_cast %73 : vector<1x1x32xf32> to vector<1x32xf32>
    %cst_33 = arith.constant dense<0.000000e+00> : vector<32xf32>
    %75 = vector.multi_reduction <add>, %70, %cst_33 [1] : vector<32x32xf32> to vector<32xf32>
    %76 = vector.shape_cast %75 : vector<32xf32> to vector<32x1xf32>
    %cst_34 = arith.constant 3.200000e+01 : f32
    %77 = vector.broadcast %cst_34 : f32 to vector<32x1xf32>
    %78 = arith.divf %76, %77 : vector<32x1xf32>
    %79 = vector.broadcast %78 : vector<32x1xf32> to vector<32x32xf32>
    %80 = arith.subf %70, %79 : vector<32x32xf32>
    %81 = arith.mulf %80, %80 : vector<32x32xf32>
    %cst_35 = arith.constant dense<0.000000e+00> : vector<32xf32>
    %82 = vector.multi_reduction <add>, %81, %cst_35 [1] : vector<32x32xf32> to vector<32xf32>
    %83 = vector.shape_cast %82 : vector<32xf32> to vector<32x1xf32>
    %cst_36 = arith.constant 3.200000e+01 : f32
    %84 = vector.broadcast %cst_36 : f32 to vector<32x1xf32>
    %85 = arith.divf %83, %84 : vector<32x1xf32>
    %86 = vector.broadcast %78 : vector<32x1xf32> to vector<32x32xf32>
    %87 = arith.subf %70, %86 : vector<32x32xf32>
    %cst_37 = arith.constant 9.99999996E-13 : f32
    %88 = vector.broadcast %cst_37 : f32 to vector<32x1xf32>
    %89 = arith.addf %85, %88 : vector<32x1xf32>
    %90 = math.rsqrt %89 : vector<32x1xf32>
    %91 = vector.broadcast %90 : vector<32x1xf32> to vector<32x32xf32>
    %92 = arith.mulf %87, %91 : vector<32x32xf32>
    %93 = vector.broadcast %72 : vector<1x32xf32> to vector<32x32xf32>
    %94 = arith.mulf %92, %93 : vector<32x32xf32>
    %95 = vector.broadcast %74 : vector<1x32xf32> to vector<32x32xf32>
    %96 = arith.addf %94, %95 : vector<32x32xf32>
    %97 = arith.truncf %96 : vector<32x32xf32> to vector<32x32xbf16>
    %c0_38 = arith.constant 0 : index
    %c0_39 = arith.constant 0 : index
    %c0_40 = arith.constant 0 : index
    %98 = vector.load %arg11[%c0_38, %c0_39, %c0_40] : memref<2x32x64xbf16, #tpu.memory_space<vmem>>, vector<1x32x64xbf16>
    %99 = vector.shape_cast %98 : vector<1x32x64xbf16> to vector<32x64xbf16>
    %cst_41 = arith.constant dense<0.000000e+00> : vector<32x64xf32>
    %100 = tpu.matmul %97, %99, %cst_41 {dimension_numbers = #tpu.dot_dimension_numbers<[1], [0], [0], [1], [0, 0, 1, 1], [], []>} : vector<32x32xbf16>, vector<32x64xbf16>, vector<32x64xf32> -> vector<32x64xf32>
    %c0_42 = arith.constant 0 : index
    %c0_43 = arith.constant 0 : index
    %c0_44 = arith.constant 0 : index
    %101 = vector.load %arg12[%c0_42, %c0_43, %c0_44] : memref<2x1x64xf32, #tpu.memory_space<vmem>>, vector<1x1x64xf32>
    %102 = vector.shape_cast %101 : vector<1x1x64xf32> to vector<1x64xf32>
    %103 = vector.broadcast %102 : vector<1x64xf32> to vector<32x64xf32>
    %104 = arith.addf %100, %103 : vector<32x64xf32>
    %cst_45 = arith.constant 5.000000e-01 : f32
    %105 = vector.broadcast %cst_45 : f32 to vector<32x64xf32>
    %106 = arith.mulf %105, %104 : vector<32x64xf32>
    %cst_46 = arith.constant 4.471500e-02 : f32
    %107 = vector.broadcast %cst_46 : f32 to vector<32x64xf32>
    %108 = arith.mulf %107, %104 : vector<32x64xf32>
    %109 = arith.mulf %108, %104 : vector<32x64xf32>
    %110 = arith.mulf %109, %104 : vector<32x64xf32>
    %111 = arith.addf %104, %110 : vector<32x64xf32>
    %cst_47 = arith.constant 0.797884583 : f32
    %112 = vector.broadcast %cst_47 : f32 to vector<32x64xf32>
    %113 = arith.mulf %112, %111 : vector<32x64xf32>
    %114 = math.tanh %113 : vector<32x64xf32>
    %cst_48 = arith.constant 1.000000e+00 : f32
    %115 = vector.broadcast %cst_48 : f32 to vector<32x64xf32>
    %116 = arith.addf %115, %114 : vector<32x64xf32>
    %117 = arith.mulf %106, %116 : vector<32x64xf32>
    %118 = arith.truncf %117 : vector<32x64xf32> to vector<32x64xbf16>
    %c0_49 = arith.constant 0 : index
    %c0_50 = arith.constant 0 : index
    %c0_51 = arith.constant 0 : index
    %119 = vector.load %arg13[%c0_49, %c0_50, %c0_51] : memref<2x64x32xbf16, #tpu.memory_space<vmem>>, vector<1x64x32xbf16>
    %120 = vector.shape_cast %119 : vector<1x64x32xbf16> to vector<64x32xbf16>
    %cst_52 = arith.constant dense<0.000000e+00> : vector<32x32xf32>
    %121 = tpu.matmul %118, %120, %cst_52 {dimension_numbers = #tpu.dot_dimension_numbers<[1], [0], [0], [1], [0, 0, 1, 1], [], []>} : vector<32x64xbf16>, vector<64x32xbf16>, vector<32x32xf32> -> vector<32x32xf32>
    %c0_53 = arith.constant 0 : index
    %c0_54 = arith.constant 0 : index
    %c0_55 = arith.constant 0 : index
    %122 = vector.load %arg14[%c0_53, %c0_54, %c0_55] : memref<2x1x32xf32, #tpu.memory_space<vmem>>, vector<1x1x32xf32>
    %123 = vector.shape_cast %122 : vector<1x1x32xf32> to vector<1x32xf32>
    %124 = vector.broadcast %123 : vector<1x32xf32> to vector<32x32xf32>
    %125 = arith.addf %121, %124 : vector<32x32xf32>
    %126 = arith.addf %125, %96 : vector<32x32xf32>
    %c0_56 = arith.constant 0 : index
    %c0_57 = arith.constant 0 : index
    %c0_58 = arith.constant 0 : index
    %127 = vector.load %arg15[%c0_56, %c0_57, %c0_58] : memref<2x1x32xf32, #tpu.memory_space<vmem>>, vector<1x1x32xf32>
    %128 = vector.shape_cast %127 : vector<1x1x32xf32> to vector<1x32xf32>
    %c0_59 = arith.constant 0 : index
    %c0_60 = arith.constant 0 : index
    %c0_61 = arith.constant 0 : index
    %129 = vector.load %arg16[%c0_59, %c0_60, %c0_61] : memref<2x1x32xf32, #tpu.memory_space<vmem>>, vector<1x1x32xf32>
    %130 = vector.shape_cast %129 : vector<1x1x32xf32> to vector<1x32xf32>
    %cst_62 = arith.constant dense<0.000000e+00> : vector<32xf32>
    %131 = vector.multi_reduction <add>, %126, %cst_62 [1] : vector<32x32xf32> to vector<32xf32>
    %132 = vector.shape_cast %131 : vector<32xf32> to vector<32x1xf32>
    %cst_63 = arith.constant 3.200000e+01 : f32
    %133 = vector.broadcast %cst_63 : f32 to vector<32x1xf32>
    %134 = arith.divf %132, %133 : vector<32x1xf32>
    %135 = vector.broadcast %134 : vector<32x1xf32> to vector<32x32xf32>
    %136 = arith.subf %126, %135 : vector<32x32xf32>
    %137 = arith.mulf %136, %136 : vector<32x32xf32>
    %cst_64 = arith.constant dense<0.000000e+00> : vector<32xf32>
    %138 = vector.multi_reduction <add>, %137, %cst_64 [1] : vector<32x32xf32> to vector<32xf32>
    %139 = vector.shape_cast %138 : vector<32xf32> to vector<32x1xf32>
    %cst_65 = arith.constant 3.200000e+01 : f32
    %140 = vector.broadcast %cst_65 : f32 to vector<32x1xf32>
    %141 = arith.divf %139, %140 : vector<32x1xf32>
    %142 = vector.broadcast %134 : vector<32x1xf32> to vector<32x32xf32>
    %143 = arith.subf %126, %142 : vector<32x32xf32>
    %cst_66 = arith.constant 9.99999996E-13 : f32
    %144 = vector.broadcast %cst_66 : f32 to vector<32x1xf32>
    %145 = arith.addf %141, %144 : vector<32x1xf32>
    %146 = math.rsqrt %145 : vector<32x1xf32>
    %147 = vector.broadcast %146 : vector<32x1xf32> to vector<32x32xf32>
    %148 = arith.mulf %143, %147 : vector<32x32xf32>
    %149 = vector.broadcast %128 : vector<1x32xf32> to vector<32x32xf32>
    %150 = arith.mulf %148, %149 : vector<32x32xf32>
    %151 = vector.broadcast %130 : vector<1x32xf32> to vector<32x32xf32>
    %152 = arith.addf %150, %151 : vector<32x32xf32>
    %153 = vector.extract_strided_slice %152 {offsets = [0, 0], sizes = [16, 32], strides = [1, 1]} : vector<32x32xf32> to vector<16x32xf32>
    %154 = vector.extract_strided_slice %152 {offsets = [16, 0], sizes = [16, 32], strides = [1, 1]} : vector<32x32xf32> to vector<16x32xf32>
    %c0_67 = arith.constant 0 : index
    %c0_68 = arith.constant 0 : index
    %c0_69 = arith.constant 0 : index
    %155 = vector.load %arg2[%c0_67, %c0_68, %c0_69] : memref<2x1x1xf32, #tpu.memory_space<vmem>>, vector<2x1x1xf32>
    %156 = vector.shape_cast %153 : vector<16x32xf32> to vector<2x8x32xf32>
    %157 = vector.shape_cast %154 : vector<16x32xf32> to vector<2x8x32xf32>
    %158 = vector.broadcast %155 : vector<2x1x1xf32> to vector<2x8x32xf32>
    %159 = arith.mulf %158, %156 : vector<2x8x32xf32>
    %cst_70 = arith.constant 1.000000e+00 : f32
    %160 = vector.broadcast %cst_70 : f32 to vector<2x1x1xf32>
    %161 = arith.subf %160, %155 : vector<2x1x1xf32>
    %162 = vector.broadcast %161 : vector<2x1x1xf32> to vector<2x8x32xf32>
    %163 = arith.mulf %162, %157 : vector<2x8x32xf32>
    %164 = arith.addf %159, %163 : vector<2x8x32xf32>
    %165 = vector.shape_cast %164 : vector<2x8x32xf32> to vector<16x32xf32>
    %166 = arith.truncf %165 : vector<16x32xf32> to vector<16x32xbf16>
    %c1 = arith.constant 1 : index
    %c0_71 = arith.constant 0 : index
    %c0_72 = arith.constant 0 : index
    %167 = vector.load %arg5[%c1, %c0_71, %c0_72] : memref<2x32x96xbf16, #tpu.memory_space<vmem>>, vector<1x32x96xbf16>
    %168 = vector.shape_cast %167 : vector<1x32x96xbf16> to vector<32x96xbf16>
    %cst_73 = arith.constant dense<0.000000e+00> : vector<16x96xf32>
    %169 = tpu.matmul %166, %168, %cst_73 {dimension_numbers = #tpu.dot_dimension_numbers<[1], [0], [0], [1], [0, 0, 1, 1], [], []>} : vector<16x32xbf16>, vector<32x96xbf16>, vector<16x96xf32> -> vector<16x96xf32>
    %c1_74 = arith.constant 1 : index
    %c0_75 = arith.constant 0 : index
    %c0_76 = arith.constant 0 : index
    %170 = vector.load %arg6[%c1_74, %c0_75, %c0_76] : memref<2x1x96xf32, #tpu.memory_space<vmem>>, vector<1x1x96xf32>
    %171 = vector.shape_cast %170 : vector<1x1x96xf32> to vector<1x96xf32>
    %172 = vector.broadcast %171 : vector<1x96xf32> to vector<16x96xf32>
    %173 = arith.addf %169, %172 : vector<16x96xf32>
    %174 = vector.extract_strided_slice %173 {offsets = [0, 0], sizes = [16, 32], strides = [1, 1]} : vector<16x96xf32> to vector<16x32xf32>
    %175 = vector.shape_cast %174 : vector<16x32xf32> to vector<2x8x32xf32>
    %176 = vector.extract_strided_slice %173 {offsets = [0, 32], sizes = [16, 32], strides = [1, 1]} : vector<16x96xf32> to vector<16x32xf32>
    %177 = vector.shape_cast %176 : vector<16x32xf32> to vector<2x8x32xf32>
    %178 = vector.extract_strided_slice %173 {offsets = [0, 64], sizes = [16, 32], strides = [1, 1]} : vector<16x96xf32> to vector<16x32xf32>
    %179 = vector.shape_cast %178 : vector<16x32xf32> to vector<2x8x32xf32>
    %180 = vector.extract_strided_slice %175 {offsets = [0, 0, 0], sizes = [2, 8, 8], strides = [1, 1, 1]} : vector<2x8x32xf32> to vector<2x8x8xf32>
    %181 = vector.extract_strided_slice %175 {offsets = [0, 0, 8], sizes = [2, 8, 8], strides = [1, 1, 1]} : vector<2x8x32xf32> to vector<2x8x8xf32>
    %182 = vector.extract_strided_slice %175 {offsets = [0, 0, 16], sizes = [2, 8, 8], strides = [1, 1, 1]} : vector<2x8x32xf32> to vector<2x8x8xf32>
    %183 = vector.extract_strided_slice %175 {offsets = [0, 0, 24], sizes = [2, 8, 8], strides = [1, 1, 1]} : vector<2x8x32xf32> to vector<2x8x8xf32>
    %184 = tpu.concatenate %180, %181, %182, %183 in 0 : vector<2x8x8xf32>, vector<2x8x8xf32>, vector<2x8x8xf32>, vector<2x8x8xf32> -> vector<8x8x8xf32>
    %cst_77 = arith.constant 0.353553385 : f32
    %185 = vector.broadcast %cst_77 : f32 to vector<8x8x8xf32>
    %186 = arith.mulf %184, %185 : vector<8x8x8xf32>
    %187 = arith.truncf %186 : vector<8x8x8xf32> to vector<8x8x8xbf16>
    %188 = vector.extract_strided_slice %177 {offsets = [0, 0, 0], sizes = [2, 8, 8], strides = [1, 1, 1]} : vector<2x8x32xf32> to vector<2x8x8xf32>
    %189 = vector.extract_strided_slice %177 {offsets = [0, 0, 8], sizes = [2, 8, 8], strides = [1, 1, 1]} : vector<2x8x32xf32> to vector<2x8x8xf32>
    %190 = vector.extract_strided_slice %177 {offsets = [0, 0, 16], sizes = [2, 8, 8], strides = [1, 1, 1]} : vector<2x8x32xf32> to vector<2x8x8xf32>
    %191 = vector.extract_strided_slice %177 {offsets = [0, 0, 24], sizes = [2, 8, 8], strides = [1, 1, 1]} : vector<2x8x32xf32> to vector<2x8x8xf32>
    %192 = tpu.concatenate %188, %189, %190, %191 in 0 : vector<2x8x8xf32>, vector<2x8x8xf32>, vector<2x8x8xf32>, vector<2x8x8xf32> -> vector<8x8x8xf32>
    %193 = arith.truncf %192 : vector<8x8x8xf32> to vector<8x8x8xbf16>
    %194 = vector.extract_strided_slice %179 {offsets = [0, 0, 0], sizes = [2, 8, 8], strides = [1, 1, 1]} : vector<2x8x32xf32> to vector<2x8x8xf32>
    %195 = vector.extract_strided_slice %179 {offsets = [0, 0, 8], sizes = [2, 8, 8], strides = [1, 1, 1]} : vector<2x8x32xf32> to vector<2x8x8xf32>
    %196 = vector.extract_strided_slice %179 {offsets = [0, 0, 16], sizes = [2, 8, 8], strides = [1, 1, 1]} : vector<2x8x32xf32> to vector<2x8x8xf32>
    %197 = vector.extract_strided_slice %179 {offsets = [0, 0, 24], sizes = [2, 8, 8], strides = [1, 1, 1]} : vector<2x8x32xf32> to vector<2x8x8xf32>
    %198 = tpu.concatenate %194, %195, %196, %197 in 0 : vector<2x8x8xf32>, vector<2x8x8xf32>, vector<2x8x8xf32>, vector<2x8x8xf32> -> vector<8x8x8xf32>
    %199 = arith.truncf %198 : vector<8x8x8xf32> to vector<8x8x8xbf16>
    %200 = tpu.concatenate %1, %1, %1, %1 in 0 : vector<2x1x8xf32>, vector<2x1x8xf32>, vector<2x1x8xf32>, vector<2x1x8xf32> -> vector<8x1x8xf32>
    "tpu.trace_start"() <{level = 10 : i32, message = "bqd,bkd->bqk"}> : () -> ()
    %cst_78 = arith.constant dense<0.000000e+00> : vector<8x8x8xf32>
    %201 = tpu.matmul %187, %193, %cst_78 {dimension_numbers = #tpu.dot_dimension_numbers<[2], [2], [1], [1], [0, 0, 0, 1, 1, 1], [0], [0]>} : vector<8x8x8xbf16>, vector<8x8x8xbf16>, vector<8x8x8xf32> -> vector<8x8x8xf32>
    "tpu.trace_stop"() : () -> ()
    %202 = vector.broadcast %200 : vector<8x1x8xf32> to vector<8x8x8xf32>
    %203 = arith.addf %201, %202 : vector<8x8x8xf32>
    %cst_79 = arith.constant dense<0xFF800000> : vector<8x8xf32>
    %204 = vector.multi_reduction <maximumf>, %203, %cst_79 [2] : vector<8x8x8xf32> to vector<8x8xf32>
    %205 = vector.shape_cast %204 : vector<8x8xf32> to vector<8x8x1xf32>
    %206 = vector.broadcast %205 : vector<8x8x1xf32> to vector<8x8x8xf32>
    %207 = arith.subf %203, %206 : vector<8x8x8xf32>
    %208 = math.exp %207 : vector<8x8x8xf32>
    %cst_80 = arith.constant dense<0.000000e+00> : vector<8x8xf32>
    %209 = vector.multi_reduction <add>, %208, %cst_80 [2] : vector<8x8x8xf32> to vector<8x8xf32>
    %210 = vector.shape_cast %209 : vector<8x8xf32> to vector<8x8x1xf32>
    %211 = tpu.reciprocal %210 {approx = true} : vector<8x8x1xf32> -> vector<8x8x1xf32>
    %212 = vector.broadcast %211 : vector<8x8x1xf32> to vector<8x8x8xf32>
    %213 = arith.mulf %208, %212 : vector<8x8x8xf32>
    %214 = arith.truncf %213 : vector<8x8x8xf32> to vector<8x8x8xbf16>
    "tpu.trace_start"() <{level = 10 : i32, message = "bqk,bkd->bqd"}> : () -> ()
    %cst_81 = arith.constant dense<0.000000e+00> : vector<8x8x8xf32>
    %215 = tpu.matmul %214, %199, %cst_81 {dimension_numbers = #tpu.dot_dimension_numbers<[2], [1], [1], [2], [0, 0, 0, 1, 1, 2], [0], [0]>} : vector<8x8x8xbf16>, vector<8x8x8xbf16>, vector<8x8x8xf32> -> vector<8x8x8xf32>
    "tpu.trace_stop"() : () -> ()
    %216 = vector.extract_strided_slice %215 {offsets = [0, 0, 0], sizes = [2, 8, 8], strides = [1, 1, 1]} : vector<8x8x8xf32> to vector<2x8x8xf32>
    %217 = vector.extract_strided_slice %215 {offsets = [2, 0, 0], sizes = [2, 8, 8], strides = [1, 1, 1]} : vector<8x8x8xf32> to vector<2x8x8xf32>
    %218 = vector.extract_strided_slice %215 {offsets = [4, 0, 0], sizes = [2, 8, 8], strides = [1, 1, 1]} : vector<8x8x8xf32> to vector<2x8x8xf32>
    %219 = vector.extract_strided_slice %215 {offsets = [6, 0, 0], sizes = [2, 8, 8], strides = [1, 1, 1]} : vector<8x8x8xf32> to vector<2x8x8xf32>
    %220 = tpu.concatenate %216, %217, %218, %219 in 2 : vector<2x8x8xf32>, vector<2x8x8xf32>, vector<2x8x8xf32>, vector<2x8x8xf32> -> vector<2x8x32xf32>
    %221 = vector.shape_cast %220 : vector<2x8x32xf32> to vector<16x32xf32>
    %222 = arith.truncf %221 : vector<16x32xf32> to vector<16x32xbf16>
    %c1_82 = arith.constant 1 : index
    %c0_83 = arith.constant 0 : index
    %c0_84 = arith.constant 0 : index
    %223 = vector.load %arg7[%c1_82, %c0_83, %c0_84] : memref<2x32x32xbf16, #tpu.memory_space<vmem>>, vector<1x32x32xbf16>
    %224 = vector.shape_cast %223 : vector<1x32x32xbf16> to vector<32x32xbf16>
    %cst_85 = arith.constant dense<0.000000e+00> : vector<16x32xf32>
    %225 = tpu.matmul %222, %224, %cst_85 {dimension_numbers = #tpu.dot_dimension_numbers<[1], [0], [0], [1], [0, 0, 1, 1], [], []>} : vector<16x32xbf16>, vector<32x32xbf16>, vector<16x32xf32> -> vector<16x32xf32>
    %c1_86 = arith.constant 1 : index
    %c0_87 = arith.constant 0 : index
    %c0_88 = arith.constant 0 : index
    %226 = vector.load %arg8[%c1_86, %c0_87, %c0_88] : memref<2x1x32xf32, #tpu.memory_space<vmem>>, vector<1x1x32xf32>
    %227 = vector.shape_cast %226 : vector<1x1x32xf32> to vector<1x32xf32>
    %228 = vector.broadcast %227 : vector<1x32xf32> to vector<16x32xf32>
    %229 = arith.addf %225, %228 : vector<16x32xf32>
    %230 = arith.addf %229, %165 : vector<16x32xf32>
    %c1_89 = arith.constant 1 : index
    %c0_90 = arith.constant 0 : index
    %c0_91 = arith.constant 0 : index
    %231 = vector.load %arg9[%c1_89, %c0_90, %c0_91] : memref<2x1x32xf32, #tpu.memory_space<vmem>>, vector<1x1x32xf32>
    %232 = vector.shape_cast %231 : vector<1x1x32xf32> to vector<1x32xf32>
    %c1_92 = arith.constant 1 : index
    %c0_93 = arith.constant 0 : index
    %c0_94 = arith.constant 0 : index
    %233 = vector.load %arg10[%c1_92, %c0_93, %c0_94] : memref<2x1x32xf32, #tpu.memory_space<vmem>>, vector<1x1x32xf32>
    %234 = vector.shape_cast %233 : vector<1x1x32xf32> to vector<1x32xf32>
    %cst_95 = arith.constant dense<0.000000e+00> : vector<16xf32>
    %235 = vector.multi_reduction <add>, %230, %cst_95 [1] : vector<16x32xf32> to vector<16xf32>
    %236 = vector.shape_cast %235 : vector<16xf32> to vector<16x1xf32>
    %cst_96 = arith.constant 3.200000e+01 : f32
    %237 = vector.broadcast %cst_96 : f32 to vector<16x1xf32>
    %238 = arith.divf %236, %237 : vector<16x1xf32>
    %239 = vector.broadcast %238 : vector<16x1xf32> to vector<16x32xf32>
    %240 = arith.subf %230, %239 : vector<16x32xf32>
    %241 = arith.mulf %240, %240 : vector<16x32xf32>
    %cst_97 = arith.constant dense<0.000000e+00> : vector<16xf32>
    %242 = vector.multi_reduction <add>, %241, %cst_97 [1] : vector<16x32xf32> to vector<16xf32>
    %243 = vector.shape_cast %242 : vector<16xf32> to vector<16x1xf32>
    %cst_98 = arith.constant 3.200000e+01 : f32
    %244 = vector.broadcast %cst_98 : f32 to vector<16x1xf32>
    %245 = arith.divf %243, %244 : vector<16x1xf32>
    %246 = vector.broadcast %238 : vector<16x1xf32> to vector<16x32xf32>
    %247 = arith.subf %230, %246 : vector<16x32xf32>
    %cst_99 = arith.constant 9.99999996E-13 : f32
    %248 = vector.broadcast %cst_99 : f32 to vector<16x1xf32>
    %249 = arith.addf %245, %248 : vector<16x1xf32>
    %250 = math.rsqrt %249 : vector<16x1xf32>
    %251 = vector.broadcast %250 : vector<16x1xf32> to vector<16x32xf32>
    %252 = arith.mulf %247, %251 : vector<16x32xf32>
    %253 = vector.broadcast %232 : vector<1x32xf32> to vector<16x32xf32>
    %254 = arith.mulf %252, %253 : vector<16x32xf32>
    %255 = vector.broadcast %234 : vector<1x32xf32> to vector<16x32xf32>
    %256 = arith.addf %254, %255 : vector<16x32xf32>
    %257 = arith.truncf %256 : vector<16x32xf32> to vector<16x32xbf16>
    %c1_100 = arith.constant 1 : index
    %c0_101 = arith.constant 0 : index
    %c0_102 = arith.constant 0 : index
    %258 = vector.load %arg11[%c1_100, %c0_101, %c0_102] : memref<2x32x64xbf16, #tpu.memory_space<vmem>>, vector<1x32x64xbf16>
    %259 = vector.shape_cast %258 : vector<1x32x64xbf16> to vector<32x64xbf16>
    %cst_103 = arith.constant dense<0.000000e+00> : vector<16x64xf32>
    %260 = tpu.matmul %257, %259, %cst_103 {dimension_numbers = #tpu.dot_dimension_numbers<[1], [0], [0], [1], [0, 0, 1, 1], [], []>} : vector<16x32xbf16>, vector<32x64xbf16>, vector<16x64xf32> -> vector<16x64xf32>
    %c1_104 = arith.constant 1 : index
    %c0_105 = arith.constant 0 : index
    %c0_106 = arith.constant 0 : index
    %261 = vector.load %arg12[%c1_104, %c0_105, %c0_106] : memref<2x1x64xf32, #tpu.memory_space<vmem>>, vector<1x1x64xf32>
    %262 = vector.shape_cast %261 : vector<1x1x64xf32> to vector<1x64xf32>
    %263 = vector.broadcast %262 : vector<1x64xf32> to vector<16x64xf32>
    %264 = arith.addf %260, %263 : vector<16x64xf32>
    %cst_107 = arith.constant 5.000000e-01 : f32
    %265 = vector.broadcast %cst_107 : f32 to vector<16x64xf32>
    %266 = arith.mulf %265, %264 : vector<16x64xf32>
    %cst_108 = arith.constant 4.471500e-02 : f32
    %267 = vector.broadcast %cst_108 : f32 to vector<16x64xf32>
    %268 = arith.mulf %267, %264 : vector<16x64xf32>
    %269 = arith.mulf %268, %264 : vector<16x64xf32>
    %270 = arith.mulf %269, %264 : vector<16x64xf32>
    %271 = arith.addf %264, %270 : vector<16x64xf32>
    %cst_109 = arith.constant 0.797884583 : f32
    %272 = vector.broadcast %cst_109 : f32 to vector<16x64xf32>
    %273 = arith.mulf %272, %271 : vector<16x64xf32>
    %274 = math.tanh %273 : vector<16x64xf32>
    %cst_110 = arith.constant 1.000000e+00 : f32
    %275 = vector.broadcast %cst_110 : f32 to vector<16x64xf32>
    %276 = arith.addf %275, %274 : vector<16x64xf32>
    %277 = arith.mulf %266, %276 : vector<16x64xf32>
    %278 = arith.truncf %277 : vector<16x64xf32> to vector<16x64xbf16>
    %c1_111 = arith.constant 1 : index
    %c0_112 = arith.constant 0 : index
    %c0_113 = arith.constant 0 : index
    %279 = vector.load %arg13[%c1_111, %c0_112, %c0_113] : memref<2x64x32xbf16, #tpu.memory_space<vmem>>, vector<1x64x32xbf16>
    %280 = vector.shape_cast %279 : vector<1x64x32xbf16> to vector<64x32xbf16>
    %cst_114 = arith.constant dense<0.000000e+00> : vector<16x32xf32>
    %281 = tpu.matmul %278, %280, %cst_114 {dimension_numbers = #tpu.dot_dimension_numbers<[1], [0], [0], [1], [0, 0, 1, 1], [], []>} : vector<16x64xbf16>, vector<64x32xbf16>, vector<16x32xf32> -> vector<16x32xf32>
    %c1_115 = arith.constant 1 : index
    %c0_116 = arith.constant 0 : index
    %c0_117 = arith.constant 0 : index
    %282 = vector.load %arg14[%c1_115, %c0_116, %c0_117] : memref<2x1x32xf32, #tpu.memory_space<vmem>>, vector<1x1x32xf32>
    %283 = vector.shape_cast %282 : vector<1x1x32xf32> to vector<1x32xf32>
    %284 = vector.broadcast %283 : vector<1x32xf32> to vector<16x32xf32>
    %285 = arith.addf %281, %284 : vector<16x32xf32>
    %286 = arith.addf %285, %256 : vector<16x32xf32>
    %c1_118 = arith.constant 1 : index
    %c0_119 = arith.constant 0 : index
    %c0_120 = arith.constant 0 : index
    %287 = vector.load %arg15[%c1_118, %c0_119, %c0_120] : memref<2x1x32xf32, #tpu.memory_space<vmem>>, vector<1x1x32xf32>
    %288 = vector.shape_cast %287 : vector<1x1x32xf32> to vector<1x32xf32>
    %c1_121 = arith.constant 1 : index
    %c0_122 = arith.constant 0 : index
    %c0_123 = arith.constant 0 : index
    %289 = vector.load %arg16[%c1_121, %c0_122, %c0_123] : memref<2x1x32xf32, #tpu.memory_space<vmem>>, vector<1x1x32xf32>
    %290 = vector.shape_cast %289 : vector<1x1x32xf32> to vector<1x32xf32>
    %cst_124 = arith.constant dense<0.000000e+00> : vector<16xf32>
    %291 = vector.multi_reduction <add>, %286, %cst_124 [1] : vector<16x32xf32> to vector<16xf32>
    %292 = vector.shape_cast %291 : vector<16xf32> to vector<16x1xf32>
    %cst_125 = arith.constant 3.200000e+01 : f32
    %293 = vector.broadcast %cst_125 : f32 to vector<16x1xf32>
    %294 = arith.divf %292, %293 : vector<16x1xf32>
    %295 = vector.broadcast %294 : vector<16x1xf32> to vector<16x32xf32>
    %296 = arith.subf %286, %295 : vector<16x32xf32>
    %297 = arith.mulf %296, %296 : vector<16x32xf32>
    %cst_126 = arith.constant dense<0.000000e+00> : vector<16xf32>
    %298 = vector.multi_reduction <add>, %297, %cst_126 [1] : vector<16x32xf32> to vector<16xf32>
    %299 = vector.shape_cast %298 : vector<16xf32> to vector<16x1xf32>
    %cst_127 = arith.constant 3.200000e+01 : f32
    %300 = vector.broadcast %cst_127 : f32 to vector<16x1xf32>
    %301 = arith.divf %299, %300 : vector<16x1xf32>
    %302 = vector.broadcast %294 : vector<16x1xf32> to vector<16x32xf32>
    %303 = arith.subf %286, %302 : vector<16x32xf32>
    %cst_128 = arith.constant 9.99999996E-13 : f32
    %304 = vector.broadcast %cst_128 : f32 to vector<16x1xf32>
    %305 = arith.addf %301, %304 : vector<16x1xf32>
    %306 = math.rsqrt %305 : vector<16x1xf32>
    %307 = vector.broadcast %306 : vector<16x1xf32> to vector<16x32xf32>
    %308 = arith.mulf %303, %307 : vector<16x32xf32>
    %309 = vector.broadcast %288 : vector<1x32xf32> to vector<16x32xf32>
    %310 = arith.mulf %308, %309 : vector<16x32xf32>
    %311 = vector.broadcast %290 : vector<1x32xf32> to vector<16x32xf32>
    %312 = arith.addf %310, %311 : vector<16x32xf32>
    %c0_129 = arith.constant 0 : index
    %c0_130 = arith.constant 0 : index
    %313 = vector.load %arg17[%c0_129, %c0_130] : memref<16x32xf32, #tpu.memory_space<vmem>>, vector<16x32xf32>
    tpu.vector_store %arg17[%c0_129, %c0_130], %312 {strides = array<i32>} : memref<16x32xf32, #tpu.memory_space<vmem>>, vector<16x32xf32>,
    return
  }
}

</mosaic_0001>

<llo_original>
// kernel: tpu_custom_call.1
$region0: #{tpu_custom_call.1}
  #allocation0 [shape = 'u32[]', space=smem, size = 0x4, offset = 0x4, fixed_abs, tag = 'smem constant byte address 0x4 - core index']
  #allocation1 [shape = 'u32[72,128]{1,0:T(1,128)}', space=vmem, size = 0x9000, scoped, tag = 'internal scratch']
  %s0 = inlined_call_operand.hbm [shape: f32[16,32], index: 0, kind: input, shape index: {}]
  %s1 = inlined_call_operand.hbm [shape: f32[16,32], index: 1, kind: input, shape index: {}]
  %s2 = inlined_call_operand.vmem [shape: f32[2,1,1], index: 2, kind: input, shape index: {}]
  %s3 = inlined_call_operand.vmem [shape: f32[2,1,8], index: 3, kind: input, shape index: {}]
  %s4 = inlined_call_operand.vmem [shape: f32[2,1,8], index: 4, kind: input, shape index: {}]
  %s5 = inlined_call_operand.vmem [shape: bf16[2,32,96], index: 5, kind: input, shape index: {}]
  %s6 = inlined_call_operand.vmem [shape: f32[2,1,96], index: 6, kind: input, shape index: {}]
  %s7 = inlined_call_operand.vmem [shape: bf16[2,32,32], index: 7, kind: input, shape index: {}]
  %s8 = inlined_call_operand.vmem [shape: f32[2,1,32], index: 8, kind: input, shape index: {}]
  %s9 = inlined_call_operand.vmem [shape: f32[2,1,32], index: 9, kind: input, shape index: {}]
  %s10 = inlined_call_operand.vmem [shape: f32[2,1,32], index: 10, kind: input, shape index: {}]
  %s11 = inlined_call_operand.vmem [shape: bf16[2,32,64], index: 11, kind: input, shape index: {}]
  %s12 = inlined_call_operand.vmem [shape: f32[2,1,64], index: 12, kind: input, shape index: {}]
  %s13 = inlined_call_operand.vmem [shape: bf16[2,64,32], index: 13, kind: input, shape index: {}]
  %s14 = inlined_call_operand.vmem [shape: f32[2,1,32], index: 14, kind: input, shape index: {}]
  %s15 = inlined_call_operand.hbm [shape: f32[2,1,32], index: 15, kind: input, shape index: {}]
  %s16 = inlined_call_operand.vmem [shape: f32[2,1,32], index: 16, kind: input, shape index: {}]
  %s17 = inlined_call_operand.hbm [shape: f32[16,32], index: 17, kind: output, shape index: {}]
  %s18 = sld [smem:[#allocation0]]
  $region90: #{tpu_custom_call.1} parent=0
    _
  %s20 = ssub.s32 1, %s18
  %s21 = scalar_select 0, %s20, %s18
  $region1: #{tpu_custom_call.1} parent=0
    #allocation2 [shape = 'u8[8192]{0}', space=vmem, size = 0x2000, scoped, tag = 'input window, operand 0, single buffered']
    #allocation3 [shape = 's32[1]{0}', space=sflag, size = 0x4, scoped, tag = 'scoped memory for tpu_custom_call.1']
    #allocation4 [shape = 's32[1]{0}', space=sflag, size = 0x4, scoped, tag = 'scoped memory for tpu_custom_call.1']
    #allocation5 [shape = 'u8[8192]{0}', space=vmem, size = 0x2000, scoped, tag = 'input window, operand 1, single buffered']
    #allocation6 [shape = 's32[1]{0}', space=sflag, size = 0x4, scoped, tag = 'scoped memory for tpu_custom_call.1']
    #allocation7 [shape = 'u8[1024]{0}', space=vmem, size = 0x400, scoped, tag = 'input window, operand 15, single buffered']
    #allocation8 [shape = 'u8[8192]{0}', space=vmem, size = 0x2000, scoped, tag = 'output window, operand 0, single buffered']
    %22 = vsyncpa [#allocation3], 0
    %23 = vsyncpa [#allocation6], 0
    %24 = vsyncpa [#allocation4], 0
    // Predicated region
    $region2: #{tpu_custom_call.1} parent=1 // pred_check
      _
    $region3: #{tpu_custom_call.1} parent=1 // pred_check_branch
      %26 = sbr.rel (0) target = $region5
    $region4: #{tpu_custom_call.1} parent=1 // pred_region
      %28 = vsyncadd [#allocation3], 0
      %s29 = sshll.u32 %s0, 4
      %s30 = int_to_ptr.hbm [resolvable:$true] %s29
      %s31 = sshll.u32 [#allocation2], 4
      %s32 = int_to_ptr.vmem [resolvable:$true] %s31
      %37 = dma.hbm_to_vmem [thread:$0]  %s30, 256, %s32, [#allocation3], 128, 128, 8
    $region5: #{tpu_custom_call.1} parent=1 // pred_fallthru
      _
    // Predicated region
    $region6: #{tpu_custom_call.1} parent=1 // pred_check
      _
    $region7: #{tpu_custom_call.1} parent=1 // pred_check_branch
      %39 = sbr.rel (0) target = $region9
    $region8: #{tpu_custom_call.1} parent=1 // pred_region
      %41 = vsyncadd [#allocation6], 0
      %s42 = sshll.u32 %s1, 4
      %s43 = int_to_ptr.hbm [resolvable:$true] %s42
      %s44 = sshll.u32 [#allocation5], 4
      %s45 = int_to_ptr.vmem [resolvable:$true] %s44
      %50 = dma.hbm_to_vmem [thread:$0]  %s43, 256, %s45, [#allocation6], 128, 128, 8
    $region9: #{tpu_custom_call.1} parent=1 // pred_fallthru
      _
    // Predicated region
    $region10: #{tpu_custom_call.1} parent=1 // pred_check
      _
    $region11: #{tpu_custom_call.1} parent=1 // pred_check_branch
      %52 = sbr.rel (0) target = $region13
    $region12: #{tpu_custom_call.1} parent=1 // pred_region
      _
    $region13: #{tpu_custom_call.1} parent=1 // pred_fallthru
      _
    // Predicated region
    $region14: #{tpu_custom_call.1} parent=1 // pred_check
      _
    $region15: #{tpu_custom_call.1} parent=1 // pred_check_branch
      %54 = sbr.rel (0) target = $region17
    $region16: #{tpu_custom_call.1} parent=1 // pred_region
      _
    $region17: #{tpu_custom_call.1} parent=1 // pred_fallthru
      _
    // Predicated region
    $region18: #{tpu_custom_call.1} parent=1 // pred_check
      _
    $region19: #{tpu_custom_call.1} parent=1 // pred_check_branch
      %56 = sbr.rel (0) target = $region21
    $region20: #{tpu_custom_call.1} parent=1 // pred_region
      _
    $region21: #{tpu_custom_call.1} parent=1 // pred_fallthru
      _
    // Predicated region
    $region22: #{tpu_custom_call.1} parent=1 // pred_check
      _
    $region23: #{tpu_custom_call.1} parent=1 // pred_check_branch
      %58 = sbr.rel (0) target = $region25
    $region24: #{tpu_custom_call.1} parent=1 // pred_region
      _
    $region25: #{tpu_custom_call.1} parent=1 // pred_fallthru
      _
    // Predicated region
    $region26: #{tpu_custom_call.1} parent=1 // pred_check
      _
    $region27: #{tpu_custom_call.1} parent=1 // pred_check_branch
      %60 = sbr.rel (0) target = $region29
    $region28: #{tpu_custom_call.1} parent=1 // pred_region
      _
    $region29: #{tpu_custom_call.1} parent=1 // pred_fallthru
      _
    // Predicated region
    $region30: #{tpu_custom_call.1} parent=1 // pred_check
      _
    $region31: #{tpu_custom_call.1} parent=1 // pred_check_branch
      %62 = sbr.rel (0) target = $region33
    $region32: #{tpu_custom_call.1} parent=1 // pred_region
      _
    $region33: #{tpu_custom_call.1} parent=1 // pred_fallthru
      _
    // Predicated region
    $region34: #{tpu_custom_call.1} parent=1 // pred_check
      _
    $region35: #{tpu_custom_call.1} parent=1 // pred_check_branch
      %64 = sbr.rel (0) target = $region37
    $region36: #{tpu_custom_call.1} parent=1 // pred_region
      _
    $region37: #{tpu_custom_call.1} parent=1 // pred_fallthru
      _
    // Predicated region
    $region38: #{tpu_custom_call.1} parent=1 // pred_check
      _
    $region39: #{tpu_custom_call.1} parent=1 // pred_check_branch
      %66 = sbr.rel (0) target = $region41
    $region40: #{tpu_custom_call.1} parent=1 // pred_region
      _
    $region41: #{tpu_custom_call.1} parent=1 // pred_fallthru
      _
    // Predicated region
    $region42: #{tpu_custom_call.1} parent=1 // pred_check
      _
    $region43: #{tpu_custom_call.1} parent=1 // pred_check_branch
      %68 = sbr.rel (0) target = $region45
    $region44: #{tpu_custom_call.1} parent=1 // pred_region
      _
    $region45: #{tpu_custom_call.1} parent=1 // pred_fallthru
      _
    // Predicated region
    $region46: #{tpu_custom_call.1} parent=1 // pred_check
      _
    $region47: #{tpu_custom_call.1} parent=1 // pred_check_branch
      %70 = sbr.rel (0) target = $region49
    $region48: #{tpu_custom_call.1} parent=1 // pred_region
      _
    $region49: #{tpu_custom_call.1} parent=1 // pred_fallthru
      _
    // Predicated region
    $region50: #{tpu_custom_call.1} parent=1 // pred_check
      _
    $region51: #{tpu_custom_call.1} parent=1 // pred_check_branch
      %72 = sbr.rel (0) target = $region53
    $region52: #{tpu_custom_call.1} parent=1 // pred_region
      _
    $region53: #{tpu_custom_call.1} parent=1 // pred_fallthru
      _
    // Predicated region
    $region54: #{tpu_custom_call.1} parent=1 // pred_check
      _
    $region55: #{tpu_custom_call.1} parent=1 // pred_check_branch
      %74 = sbr.rel (0) target = $region57
    $region56: #{tpu_custom_call.1} parent=1 // pred_region
      _
    $region57: #{tpu_custom_call.1} parent=1 // pred_fallthru
      _
    // Predicated region
    $region58: #{tpu_custom_call.1} parent=1 // pred_check
      _
    $region59: #{tpu_custom_call.1} parent=1 // pred_check_branch
      %76 = sbr.rel (0) target = $region61
    $region60: #{tpu_custom_call.1} parent=1 // pred_region
      _
    $region61: #{tpu_custom_call.1} parent=1 // pred_fallthru
      _
    // Predicated region
    $region62: #{tpu_custom_call.1} parent=1 // pred_check
      _
    $region63: #{tpu_custom_call.1} parent=1 // pred_check_branch
      %78 = sbr.rel (0) target = $region65
    $region64: #{tpu_custom_call.1} parent=1 // pred_region
      %80 = vsyncadd [#allocation6], 0
      %s81 = sshll.u32 %s15, 4
      %s82 = int_to_ptr.hbm [resolvable:$true] %s81
      %s83 = sshll.u32 [#allocation7], 4
      %s84 = int_to_ptr.vmem [resolvable:$true] %s83
      %89 = dma.hbm_to_vmem [thread:$0]  %s82, 32, %s84, [#allocation6], 16, 16, 1
    $region65: #{tpu_custom_call.1} parent=1 // pred_fallthru
      _
    // Predicated region
    $region66: #{tpu_custom_call.1} parent=1 // pred_check
      _
    $region67: #{tpu_custom_call.1} parent=1 // pred_check_branch
      %91 = sbr.rel (0) target = $region69
    $region68: #{tpu_custom_call.1} parent=1 // pred_region
      _
    $region69: #{tpu_custom_call.1} parent=1 // pred_fallthru
      _
    // Predicated region
    $region70: #{tpu_custom_call.1} parent=1 // pred_check
      _
    $region71: #{tpu_custom_call.1} parent=1 // pred_check_branch
      %93 = sbr.rel (0) target = $region73
    $region72: #{tpu_custom_call.1} parent=1 // pred_region
      %95 = dma.done [#allocation3], 256
    $region73: #{tpu_custom_call.1} parent=1 // pred_fallthru
      _
    // Predicated region
    $region74: #{tpu_custom_call.1} parent=1 // pred_check
      _
    $region75: #{tpu_custom_call.1} parent=1 // pred_check_branch
      %97 = sbr.rel (0) target = $region77
    $region76: #{tpu_custom_call.1} parent=1 // pred_region
      %99 = dma.done [#allocation6], 256
    $region77: #{tpu_custom_call.1} parent=1 // pred_fallthru
      _
    // Predicated region
    $region78: #{tpu_custom_call.1} parent=1 // pred_check
      _
    $region79: #{tpu_custom_call.1} parent=1 // pred_check_branch
      %101 = sbr.rel (0) target = $region81
    $region80: #{tpu_custom_call.1} parent=1 // pred_region
      %103 = dma.done [#allocation6], 32
    $region81: #{tpu_custom_call.1} parent=1 // pred_fallthru
      _
    %v105 = vld [vmem:[#allocation2] sm:$0xff]
    %v106 = vld [vmem:[#allocation2 + $0x8] sm:$0xff]
    %v107 = vld [vmem:[%s3] sm:$0x1]
    %v108 = vld [vmem:[%s3 + $0x1] sm:$0x1]
    %v109 = vld [vmem:[#allocation5] sm:$0xff]
    %v110 = vld [vmem:[#allocation5 + $0x8] sm:$0xff]
    %v111 = vld [vmem:[%s4] sm:$0x1]
    %v112 = vld [vmem:[%s4 + $0x1] sm:$0x1]
    %v113 = vpack.c.bf16 %v106, %v105
    %v114 = vpack.c.bf16 %v110, %v109
    %v115 = vld [vmem:[%s5] sm:$0xf]
    %v116 = vld [vmem:[%s5 + $0x4] sm:$0xf]
    %v117 = vld [vmem:[%s5 + $0x8] sm:$0xf]
    %v118 = vld [vmem:[%s5 + $0xc] sm:$0xf]
    %v119 = vld [vmem:[%s6] sm:$0x1]
    %v121 = vperm.slane %v119, 0
    %v127 = vunpack.c.l.b16 %v115
    %v128 = vunpack.c.l.b16 %v116
    %v129 = vunpack.c.l.b16 %v117
    %v130 = vunpack.c.l.b16 %v118
    %v131 = vpack.c.b16 %v128, %v127
    %v132 = vpack.c.b16 %v130, %v129
    %vm135 = vcmask 261120
    %v137 = vsel %vm135, %v113, 0
    %v140 = vsel %vm135, %v114, 0
    %142 = vmatpush.bf16.msra.mxu0 0
    %143 = vmatpush.bf16.msra.mxu0 0
    %144 = vmatpush.bf16.msra.mxu0 0
    %145 = vmatpush.bf16.msra.mxu0 0
    %146 = vmatpush.bf16.msra.mxu0 0
    %147 = vmatpush.bf16.msra.mxu0 0
    %148 = vmatpush.bf16.msra.mxu0 %v132
    %149 = vmatpush.bf16.msra.mxu0 %v131
    %150 = vmatmul.bf16.gmra.mxu0 %v137
    %v151 = vpop.f32.mrf.mxu0
    %v152 = vadd.f32 %v121, %v151
    %v153 = vpop.f32.mrf.mxu0
    %v154 = vadd.f32 %v121, %v153
    %155 = vmatmul.bf16.gmra.mxu0 %v140
    %v156 = vpop.f32.mrf.mxu0
    %v157 = vadd.f32 %v121, %v156
    %v158 = vpop.f32.mrf.mxu0
    %v159 = vadd.f32 %v121, %v158
    %160 = vdwg.mxu0
    %165 = vrot.lane.b32.xlu0 %v152, 120
    %v166 = vpop.permute.xlu0 %165
    %167 = vrot.lane.b32.xlu0 %v154, 120
    %v168 = vpop.permute.xlu0 %167
    %169 = vrot.lane.b32.xlu0 %v157, 120
    %v170 = vpop.permute.xlu0 %169
    %171 = vrot.lane.b32.xlu0 %v159, 120
    %v172 = vpop.permute.xlu0 %171
    %177 = vrot.lane.b32.xlu0 %v152, 112
    %v178 = vpop.permute.xlu0 %177
    %179 = vrot.lane.b32.xlu0 %v154, 112
    %v180 = vpop.permute.xlu0 %179
    %181 = vrot.lane.b32.xlu0 %v157, 112
    %v182 = vpop.permute.xlu0 %181
    %183 = vrot.lane.b32.xlu0 %v159, 112
    %v184 = vpop.permute.xlu0 %183
    %189 = vrot.lane.b32.xlu0 %v152, 104
    %v190 = vpop.permute.xlu0 %189
    %191 = vrot.lane.b32.xlu0 %v154, 104
    %v192 = vpop.permute.xlu0 %191
    %193 = vrot.lane.b32.xlu0 %v157, 104
    %v194 = vpop.permute.xlu0 %193
    %195 = vrot.lane.b32.xlu0 %v159, 104
    %v196 = vpop.permute.xlu0 %195
    %v201 = vmul.f32 %v152, 0.35355338
    %v202 = vmul.f32 %v154, 0.35355338
    %v203 = vmul.f32 %v157, 0.35355338
    %v204 = vmul.f32 %v159, 0.35355338
    %v205 = vmul.f32 %v166, 0.35355338
    %v206 = vmul.f32 %v168, 0.35355338
    %v207 = vmul.f32 %v170, 0.35355338
    %v208 = vmul.f32 %v172, 0.35355338
    %v209 = vmul.f32 %v178, 0.35355338
    %v210 = vmul.f32 %v180, 0.35355338
    %v211 = vmul.f32 %v182, 0.35355338
    %v212 = vmul.f32 %v184, 0.35355338
    %v213 = vmul.f32 %v190, 0.35355338
    %v214 = vmul.f32 %v192, 0.35355338
    %v215 = vmul.f32 %v194, 0.35355338
    %v216 = vmul.f32 %v196, 0.35355338
    %v217 = vpack.c.bf16 %v201, %v201
    %v218 = vpack.c.bf16 %v202, %v202
    %v219 = vpack.c.bf16 %v203, %v203
    %v220 = vpack.c.bf16 %v204, %v204
    %v221 = vpack.c.bf16 %v205, %v205
    %v222 = vpack.c.bf16 %v206, %v206
    %v223 = vpack.c.bf16 %v207, %v207
    %v224 = vpack.c.bf16 %v208, %v208
    %v225 = vpack.c.bf16 %v209, %v209
    %v226 = vpack.c.bf16 %v210, %v210
    %v227 = vpack.c.bf16 %v211, %v211
    %v228 = vpack.c.bf16 %v212, %v212
    %v229 = vpack.c.bf16 %v213, %v213
    %v230 = vpack.c.bf16 %v214, %v214
    %v231 = vpack.c.bf16 %v215, %v215
    %v232 = vpack.c.bf16 %v216, %v216
    %v233 = vpack.c.bf16 %v152, %v152
    %v234 = vpack.c.bf16 %v154, %v154
    %v235 = vpack.c.bf16 %v157, %v157
    %v236 = vpack.c.bf16 %v159, %v159
    %v237 = vpack.c.bf16 %v166, %v166
    %v238 = vpack.c.bf16 %v168, %v168
    %v239 = vpack.c.bf16 %v170, %v170
    %v240 = vpack.c.bf16 %v172, %v172
    %v241 = vpack.c.bf16 %v178, %v178
    %v242 = vpack.c.bf16 %v180, %v180
    %v243 = vpack.c.bf16 %v182, %v182
    %v244 = vpack.c.bf16 %v184, %v184
    %v245 = vpack.c.bf16 %v190, %v190
    %v246 = vpack.c.bf16 %v192, %v192
    %v247 = vpack.c.bf16 %v194, %v194
    %v248 = vpack.c.bf16 %v196, %v196
    %v253 = vperm.slane %v107, 0
    %v254 = vperm.slane %v108, 0
    %v255 = vperm.slane %v111, 0
    %v256 = vperm.slane %v112, 0
    %v262 = vunpack.c.l.b16 %v233
    %v263 = vpack.c.b16 %v262, %v262
    %264 = vrot.lane.b32.xlu0 %v263, 96
    %v265 = vpop.permute.xlu0 %264
    %vm266 = vcmask 64512
    %v268 = vsel %vm266, %v217, 0
    %v271 = vsel %vm266, %v265, 0
    %273 = vmatpush.bf16.xpose.msra.mxu0 0
    %274 = vmatpush.bf16.xpose.msra.mxu0 0
    %275 = vmatpush.bf16.xpose.msra.mxu0 0
    %276 = vmatpush.bf16.xpose.msra.mxu0 0
    %277 = vmatpush.bf16.xpose.msra.mxu0 0
    %278 = vmatpush.bf16.xpose.msra.mxu0 0
    %279 = vmatpush.bf16.xpose.msra.mxu0 0
    %280 = vmatpush.bf16.xpose.msra.mxu0 %v271
    %281 = vmatmul.bf16.gmra.mxu0 %v268
    %v282 = vpop.f32.mrf.mxu0
    %v283 = vadd.f32 %v253, %v282
    %v284 = vpop.f32.mrf.mxu0
    %285 = vdwg.mxu0
    %v287 = vunpack.c.l.b16 %v234
    %v288 = vpack.c.b16 %v287, %v287
    %289 = vrot.lane.b32.xlu0 %v288, 96
    %v290 = vpop.permute.xlu0 %289
    %v292 = vsel %vm266, %v218, 0
    %v295 = vsel %vm266, %v290, 0
    %297 = vmatpush.bf16.xpose.msra.mxu0 0
    %298 = vmatpush.bf16.xpose.msra.mxu0 0
    %299 = vmatpush.bf16.xpose.msra.mxu0 0
    %300 = vmatpush.bf16.xpose.msra.mxu0 0
    %301 = vmatpush.bf16.xpose.msra.mxu0 0
    %302 = vmatpush.bf16.xpose.msra.mxu0 0
    %303 = vmatpush.bf16.xpose.msra.mxu0 0
    %304 = vmatpush.bf16.xpose.msra.mxu0 %v295
    %305 = vmatmul.bf16.gmra.mxu0 %v292
    %v306 = vpop.f32.mrf.mxu0
    %v307 = vadd.f32 %v254, %v306
    %v308 = vpop.f32.mrf.mxu0
    %309 = vdwg.mxu0
    %v311 = vunpack.c.l.b16 %v235
    %v312 = vpack.c.b16 %v311, %v311
    %313 = vrot.lane.b32.xlu0 %v312, 96
    %v314 = vpop.permute.xlu0 %313
    %v316 = vsel %vm266, %v219, 0
    %v319 = vsel %vm266, %v314, 0
    %321 = vmatpush.bf16.xpose.msra.mxu0 0
    %322 = vmatpush.bf16.xpose.msra.mxu0 0
    %323 = vmatpush.bf16.xpose.msra.mxu0 0
    %324 = vmatpush.bf16.xpose.msra.mxu0 0
    %325 = vmatpush.bf16.xpose.msra.mxu0 0
    %326 = vmatpush.bf16.xpose.msra.mxu0 0
    %327 = vmatpush.bf16.xpose.msra.mxu0 0
    %328 = vmatpush.bf16.xpose.msra.mxu0 %v319
    %329 = vmatmul.bf16.gmra.mxu0 %v316
    %v330 = vpop.f32.mrf.mxu0
    %v331 = vadd.f32 %v255, %v330
    %v332 = vpop.f32.mrf.mxu0
    %333 = vdwg.mxu0
    %v335 = vunpack.c.l.b16 %v236
    %v336 = vpack.c.b16 %v335, %v335
    %337 = vrot.lane.b32.xlu0 %v336, 96
    %v338 = vpop.permute.xlu0 %337
    %v340 = vsel %vm266, %v220, 0
    %v343 = vsel %vm266, %v338, 0
    %345 = vmatpush.bf16.xpose.msra.mxu0 0
    %346 = vmatpush.bf16.xpose.msra.mxu0 0
    %347 = vmatpush.bf16.xpose.msra.mxu0 0
    %348 = vmatpush.bf16.xpose.msra.mxu0 0
    %349 = vmatpush.bf16.xpose.msra.mxu0 0
    %350 = vmatpush.bf16.xpose.msra.mxu0 0
    %351 = vmatpush.bf16.xpose.msra.mxu0 0
    %352 = vmatpush.bf16.xpose.msra.mxu0 %v343
    %353 = vmatmul.bf16.gmra.mxu0 %v340
    %v354 = vpop.f32.mrf.mxu0
    %v355 = vadd.f32 %v256, %v354
    %v356 = vpop.f32.mrf.mxu0
    %357 = vdwg.mxu0
    %v359 = vunpack.c.l.b16 %v237
    %v360 = vpack.c.b16 %v359, %v359
    %361 = vrot.lane.b32.xlu0 %v360, 96
    %v362 = vpop.permute.xlu0 %361
    %v364 = vsel %vm266, %v221, 0
    %v367 = vsel %vm266, %v362, 0
    %369 = vmatpush.bf16.xpose.msra.mxu0 0
    %370 = vmatpush.bf16.xpose.msra.mxu0 0
    %371 = vmatpush.bf16.xpose.msra.mxu0 0
    %372 = vmatpush.bf16.xpose.msra.mxu0 0
    %373 = vmatpush.bf16.xpose.msra.mxu0 0
    %374 = vmatpush.bf16.xpose.msra.mxu0 0
    %375 = vmatpush.bf16.xpose.msra.mxu0 0
    %376 = vmatpush.bf16.xpose.msra.mxu0 %v367
    %377 = vmatmul.bf16.gmra.mxu0 %v364
    %v378 = vpop.f32.mrf.mxu0
    %v379 = vadd.f32 %v253, %v378
    %v380 = vpop.f32.mrf.mxu0
    %381 = vdwg.mxu0
    %v383 = vunpack.c.l.b16 %v238
    %v384 = vpack.c.b16 %v383, %v383
    %385 = vrot.lane.b32.xlu0 %v384, 96
    %v386 = vpop.permute.xlu0 %385
    %v388 = vsel %vm266, %v222, 0
    %v391 = vsel %vm266, %v386, 0
    %393 = vmatpush.bf16.xpose.msra.mxu0 0
    %394 = vmatpush.bf16.xpose.msra.mxu0 0
    %395 = vmatpush.bf16.xpose.msra.mxu0 0
    %396 = vmatpush.bf16.xpose.msra.mxu0 0
    %397 = vmatpush.bf16.xpose.msra.mxu0 0
    %398 = vmatpush.bf16.xpose.msra.mxu0 0
    %399 = vmatpush.bf16.xpose.msra.mxu0 0
    %400 = vmatpush.bf16.xpose.msra.mxu0 %v391
    %401 = vmatmul.bf16.gmra.mxu0 %v388
    %v402 = vpop.f32.mrf.mxu0
    %v403 = vadd.f32 %v254, %v402
    %v404 = vpop.f32.mrf.mxu0
    %405 = vdwg.mxu0
    %v407 = vunpack.c.l.b16 %v239
    %v408 = vpack.c.b16 %v407, %v407
    %409 = vrot.lane.b32.xlu0 %v408, 96
    %v410 = vpop.permute.xlu0 %409
    %v412 = vsel %vm266, %v223, 0
    %v415 = vsel %vm266, %v410, 0
    %417 = vmatpush.bf16.xpose.msra.mxu0 0
    %418 = vmatpush.bf16.xpose.msra.mxu0 0
    %419 = vmatpush.bf16.xpose.msra.mxu0 0
    %420 = vmatpush.bf16.xpose.msra.mxu0 0
    %421 = vmatpush.bf16.xpose.msra.mxu0 0
    %422 = vmatpush.bf16.xpose.msra.mxu0 0
    %423 = vmatpush.bf16.xpose.msra.mxu0 0
    %424 = vmatpush.bf16.xpose.msra.mxu0 %v415
    %425 = vmatmul.bf16.gmra.mxu0 %v412
    %v426 = vpop.f32.mrf.mxu0
    %v427 = vadd.f32 %v255, %v426
    %v428 = vpop.f32.mrf.mxu0
    %429 = vdwg.mxu0
    %v431 = vunpack.c.l.b16 %v240
    %v432 = vpack.c.b16 %v431, %v431
    %433 = vrot.lane.b32.xlu0 %v432, 96
    %v434 = vpop.permute.xlu0 %433
    %v436 = vsel %vm266, %v224, 0
    %v439 = vsel %vm266, %v434, 0
    %441 = vmatpush.bf16.xpose.msra.mxu0 0
    %442 = vmatpush.bf16.xpose.msra.mxu0 0
    %443 = vmatpush.bf16.xpose.msra.mxu0 0
    %444 = vmatpush.bf16.xpose.msra.mxu0 0
    %445 = vmatpush.bf16.xpose.msra.mxu0 0
    %446 = vmatpush.bf16.xpose.msra.mxu0 0
    %447 = vmatpush.bf16.xpose.msra.mxu0 0
    %448 = vmatpush.bf16.xpose.msra.mxu0 %v439
    %449 = vmatmul.bf16.gmra.mxu0 %v436
    %v450 = vpop.f32.mrf.mxu0
    %v451 = vadd.f32 %v256, %v450
    %v452 = vpop.f32.mrf.mxu0
    %453 = vdwg.mxu0
    %v455 = vunpack.c.l.b16 %v241
    %v456 = vpack.c.b16 %v455, %v455
    %457 = vrot.lane.b32.xlu0 %v456, 96
    %v458 = vpop.permute.xlu0 %457
    %v460 = vsel %vm266, %v225, 0
    %v463 = vsel %vm266, %v458, 0
    %465 = vmatpush.bf16.xpose.msra.mxu0 0
    %466 = vmatpush.bf16.xpose.msra.mxu0 0
    %467 = vmatpush.bf16.xpose.msra.mxu0 0
    %468 = vmatpush.bf16.xpose.msra.mxu0 0
    %469 = vmatpush.bf16.xpose.msra.mxu0 0
    %470 = vmatpush.bf16.xpose.msra.mxu0 0
    %471 = vmatpush.bf16.xpose.msra.mxu0 0
    %472 = vmatpush.bf16.xpose.msra.mxu0 %v463
    %473 = vmatmul.bf16.gmra.mxu0 %v460
    %v474 = vpop.f32.mrf.mxu0
    %v475 = vadd.f32 %v253, %v474
    %v476 = vpop.f32.mrf.mxu0
    %477 = vdwg.mxu0
    %v479 = vunpack.c.l.b16 %v242
    %v480 = vpack.c.b16 %v479, %v479
    %481 = vrot.lane.b32.xlu0 %v480, 96
    %v482 = vpop.permute.xlu0 %481
    %v484 = vsel %vm266, %v226, 0
    %v487 = vsel %vm266, %v482, 0
    %489 = vmatpush.bf16.xpose.msra.mxu0 0
    %490 = vmatpush.bf16.xpose.msra.mxu0 0
    %491 = vmatpush.bf16.xpose.msra.mxu0 0
    %492 = vmatpush.bf16.xpose.msra.mxu0 0
    %493 = vmatpush.bf16.xpose.msra.mxu0 0
    %494 = vmatpush.bf16.xpose.msra.mxu0 0
    %495 = vmatpush.bf16.xpose.msra.mxu0 0
    %496 = vmatpush.bf16.xpose.msra.mxu0 %v487
    %497 = vmatmul.bf16.gmra.mxu0 %v484
    %v498 = vpop.f32.mrf.mxu0
    %v499 = vadd.f32 %v254, %v498
    %v500 = vpop.f32.mrf.mxu0
    %501 = vdwg.mxu0
    %v503 = vunpack.c.l.b16 %v243
    %v504 = vpack.c.b16 %v503, %v503
    %505 = vrot.lane.b32.xlu0 %v504, 96
    %v506 = vpop.permute.xlu0 %505
    %v508 = vsel %vm266, %v227, 0
    %v511 = vsel %vm266, %v506, 0
    %513 = vmatpush.bf16.xpose.msra.mxu0 0
    %514 = vmatpush.bf16.xpose.msra.mxu0 0
    %515 = vmatpush.bf16.xpose.msra.mxu0 0
    %516 = vmatpush.bf16.xpose.msra.mxu0 0
    %517 = vmatpush.bf16.xpose.msra.mxu0 0
    %518 = vmatpush.bf16.xpose.msra.mxu0 0
    %519 = vmatpush.bf16.xpose.msra.mxu0 0
    %520 = vmatpush.bf16.xpose.msra.mxu0 %v511
    %521 = vmatmul.bf16.gmra.mxu0 %v508
    %v522 = vpop.f32.mrf.mxu0
    %v523 = vadd.f32 %v255, %v522
    %v524 = vpop.f32.mrf.mxu0
    %525 = vdwg.mxu0
    %v527 = vunpack.c.l.b16 %v244
    %v528 = vpack.c.b16 %v527, %v527
    %529 = vrot.lane.b32.xlu0 %v528, 96
    %v530 = vpop.permute.xlu0 %529
    %v532 = vsel %vm266, %v228, 0
    %v535 = vsel %vm266, %v530, 0
    %537 = vmatpush.bf16.xpose.msra.mxu0 0
    %538 = vmatpush.bf16.xpose.msra.mxu0 0
    %539 = vmatpush.bf16.xpose.msra.mxu0 0
    %540 = vmatpush.bf16.xpose.msra.mxu0 0
    %541 = vmatpush.bf16.xpose.msra.mxu0 0
    %542 = vmatpush.bf16.xpose.msra.mxu0 0
    %543 = vmatpush.bf16.xpose.msra.mxu0 0
    %544 = vmatpush.bf16.xpose.msra.mxu0 %v535
    %545 = vmatmul.bf16.gmra.mxu0 %v532
    %v546 = vpop.f32.mrf.mxu0
    %v547 = vadd.f32 %v256, %v546
    %v548 = vpop.f32.mrf.mxu0
    %549 = vdwg.mxu0
    %v551 = vunpack.c.l.b16 %v245
    %v552 = vpack.c.b16 %v551, %v551
    %553 = vrot.lane.b32.xlu0 %v552, 96
    %v554 = vpop.permute.xlu0 %553
    %v556 = vsel %vm266, %v229, 0
    %v559 = vsel %vm266, %v554, 0
    %561 = vmatpush.bf16.xpose.msra.mxu0 0
    %562 = vmatpush.bf16.xpose.msra.mxu0 0
    %563 = vmatpush.bf16.xpose.msra.mxu0 0
    %564 = vmatpush.bf16.xpose.msra.mxu0 0
    %565 = vmatpush.bf16.xpose.msra.mxu0 0
    %566 = vmatpush.bf16.xpose.msra.mxu0 0
    %567 = vmatpush.bf16.xpose.msra.mxu0 0
    %568 = vmatpush.bf16.xpose.msra.mxu0 %v559
    %569 = vmatmul.bf16.gmra.mxu0 %v556
    %v570 = vpop.f32.mrf.mxu0
    %v571 = vadd.f32 %v253, %v570
    %v572 = vpop.f32.mrf.mxu0
    %573 = vdwg.mxu0
    %v575 = vunpack.c.l.b16 %v246
    %v576 = vpack.c.b16 %v575, %v575
    %577 = vrot.lane.b32.xlu0 %v576, 96
    %v578 = vpop.permute.xlu0 %577
    %v580 = vsel %vm266, %v230, 0
    %v583 = vsel %vm266, %v578, 0
    %585 = vmatpush.bf16.xpose.msra.mxu0 0
    %586 = vmatpush.bf16.xpose.msra.mxu0 0
    %587 = vmatpush.bf16.xpose.msra.mxu0 0
    %588 = vmatpush.bf16.xpose.msra.mxu0 0
    %589 = vmatpush.bf16.xpose.msra.mxu0 0
    %590 = vmatpush.bf16.xpose.msra.mxu0 0
    %591 = vmatpush.bf16.xpose.msra.mxu0 0
    %592 = vmatpush.bf16.xpose.msra.mxu0 %v583
    %593 = vmatmul.bf16.gmra.mxu0 %v580
    %v594 = vpop.f32.mrf.mxu0
    %v595 = vadd.f32 %v254, %v594
    %v596 = vpop.f32.mrf.mxu0
    %597 = vdwg.mxu0
    %v599 = vunpack.c.l.b16 %v247
    %v600 = vpack.c.b16 %v599, %v599
    %601 = vrot.lane.b32.xlu0 %v600, 96
    %v602 = vpop.permute.xlu0 %601
    %v604 = vsel %vm266, %v231, 0
    %v607 = vsel %vm266, %v602, 0
    %609 = vmatpush.bf16.xpose.msra.mxu0 0
    %610 = vmatpush.bf16.xpose.msra.mxu0 0
    %611 = vmatpush.bf16.xpose.msra.mxu0 0
    %612 = vmatpush.bf16.xpose.msra.mxu0 0
    %613 = vmatpush.bf16.xpose.msra.mxu0 0
    %614 = vmatpush.bf16.xpose.msra.mxu0 0
    %615 = vmatpush.bf16.xpose.msra.mxu0 0
    %616 = vmatpush.bf16.xpose.msra.mxu0 %v607
    %617 = vmatmul.bf16.gmra.mxu0 %v604
    %v618 = vpop.f32.mrf.mxu0
    %v619 = vadd.f32 %v255, %v618
    %v620 = vpop.f32.mrf.mxu0
    %621 = vdwg.mxu0
    %v623 = vunpack.c.l.b16 %v248
    %v624 = vpack.c.b16 %v623, %v623
    %625 = vrot.lane.b32.xlu0 %v624, 96
    %v626 = vpop.permute.xlu0 %625
    %v628 = vsel %vm266, %v232, 0
    %v631 = vsel %vm266, %v626, 0
    %633 = vmatpush.bf16.xpose.msra.mxu0 0
    %634 = vmatpush.bf16.xpose.msra.mxu0 0
    %635 = vmatpush.bf16.xpose.msra.mxu0 0
    %636 = vmatpush.bf16.xpose.msra.mxu0 0
    %637 = vmatpush.bf16.xpose.msra.mxu0 0
    %638 = vmatpush.bf16.xpose.msra.mxu0 0
    %639 = vmatpush.bf16.xpose.msra.mxu0 0
    %640 = vmatpush.bf16.xpose.msra.mxu0 %v631
    %641 = vmatmul.bf16.gmra.mxu0 %v628
    %v642 = vpop.f32.mrf.mxu0
    %v643 = vadd.f32 %v256, %v642
    %v644 = vpop.f32.mrf.mxu0
    %645 = vdwg.mxu0
    %v646 = vsel %vm266, %v283, -inf
    %647 = vmax.xlane.f32.xlu0 %v646
    %v648 = vpop.xlane.xlu0 %647
    %v649 = vsel %vm266, %v307, -inf
    %650 = vmax.xlane.f32.xlu0 %v649
    %v651 = vpop.xlane.xlu0 %650
    %v652 = vsel %vm266, %v331, -inf
    %653 = vmax.xlane.f32.xlu0 %v652
    %v654 = vpop.xlane.xlu0 %653
    %v655 = vsel %vm266, %v355, -inf
    %656 = vmax.xlane.f32.xlu0 %v655
    %v657 = vpop.xlane.xlu0 %656
    %v658 = vsel %vm266, %v379, -inf
    %659 = vmax.xlane.f32.xlu0 %v658
    %v660 = vpop.xlane.xlu0 %659
    %v661 = vsel %vm266, %v403, -inf
    %662 = vmax.xlane.f32.xlu0 %v661
    %v663 = vpop.xlane.xlu0 %662
    %v664 = vsel %vm266, %v427, -inf
    %665 = vmax.xlane.f32.xlu0 %v664
    %v666 = vpop.xlane.xlu0 %665
    %v667 = vsel %vm266, %v451, -inf
    %668 = vmax.xlane.f32.xlu0 %v667
    %v669 = vpop.xlane.xlu0 %668
    %v670 = vsel %vm266, %v475, -inf
    %671 = vmax.xlane.f32.xlu0 %v670
    %v672 = vpop.xlane.xlu0 %671
    %v673 = vsel %vm266, %v499, -inf
    %674 = vmax.xlane.f32.xlu0 %v673
    %v675 = vpop.xlane.xlu0 %674
    %v676 = vsel %vm266, %v523, -inf
    %677 = vmax.xlane.f32.xlu0 %v676
    %v678 = vpop.xlane.xlu0 %677
    %v679 = vsel %vm266, %v547, -inf
    %680 = vmax.xlane.f32.xlu0 %v679
    %v681 = vpop.xlane.xlu0 %680
    %v682 = vsel %vm266, %v571, -inf
    %683 = vmax.xlane.f32.xlu0 %v682
    %v684 = vpop.xlane.xlu0 %683
    %v685 = vsel %vm266, %v595, -inf
    %686 = vmax.xlane.f32.xlu0 %v685
    %v687 = vpop.xlane.xlu0 %686
    %v688 = vsel %vm266, %v619, -inf
    %689 = vmax.xlane.f32.xlu0 %v688
    %v690 = vpop.xlane.xlu0 %689
    %v691 = vsel %vm266, %v643, -inf
    %692 = vmax.xlane.f32.xlu0 %v691
    %v693 = vpop.xlane.xlu0 %692
    %v694 = vsub.f32 %v283, %v648
    %v695 = vsub.f32 %v307, %v651
    %v696 = vsub.f32 %v331, %v654
    %v697 = vsub.f32 %v355, %v657
    %v698 = vsub.f32 %v379, %v660
    %v699 = vsub.f32 %v403, %v663
    %v700 = vsub.f32 %v427, %v666
    %v701 = vsub.f32 %v451, %v669
    %v702 = vsub.f32 %v475, %v672
    %v703 = vsub.f32 %v499, %v675
    %v704 = vsub.f32 %v523, %v678
    %v705 = vsub.f32 %v547, %v681
    %v706 = vsub.f32 %v571, %v684
    %v707 = vsub.f32 %v595, %v687
    %v708 = vsub.f32 %v619, %v690
    %v709 = vsub.f32 %v643, %v693
    %v710 = vmul.f32 %v694, 1.442695
    %v711 = vpow.pop %v710
    %v712 = vmul.f32 %v695, 1.442695
    %v713 = vpow.pop %v712
    %v714 = vmul.f32 %v696, 1.442695
    %v715 = vpow.pop %v714
    %v716 = vmul.f32 %v697, 1.442695
    %v717 = vpow.pop %v716
    %v718 = vmul.f32 %v698, 1.442695
    %v719 = vpow.pop %v718
    %v720 = vmul.f32 %v699, 1.442695
    %v721 = vpow.pop %v720
    %v722 = vmul.f32 %v700, 1.442695
    %v723 = vpow.pop %v722
    %v724 = vmul.f32 %v701, 1.442695
    %v725 = vpow.pop %v724
    %v726 = vmul.f32 %v702, 1.442695
    %v727 = vpow.pop %v726
    %v728 = vmul.f32 %v703, 1.442695
    %v729 = vpow.pop %v728
    %v730 = vmul.f32 %v704, 1.442695
    %v731 = vpow.pop %v730
    %v732 = vmul.f32 %v705, 1.442695
    %v733 = vpow.pop %v732
    %v734 = vmul.f32 %v706, 1.442695
    %v735 = vpow.pop %v734
    %v736 = vmul.f32 %v707, 1.442695
    %v737 = vpow.pop %v736
    %v738 = vmul.f32 %v708, 1.442695
    %v739 = vpow.pop %v738
    %v740 = vmul.f32 %v709, 1.442695
    %v741 = vpow.pop %v740
    %v742 = vsel %vm266, %v711, 0.0
    %743 = vadd.xlane.f32.xlu0 %v742
    %v744 = vpop.xlane.xlu0 %743
    %v745 = vsel %vm266, %v713, 0.0
    %746 = vadd.xlane.f32.xlu0 %v745
    %v747 = vpop.xlane.xlu0 %746
    %v748 = vsel %vm266, %v715, 0.0
    %749 = vadd.xlane.f32.xlu0 %v748
    %v750 = vpop.xlane.xlu0 %749
    %v751 = vsel %vm266, %v717, 0.0
    %752 = vadd.xlane.f32.xlu0 %v751
    %v753 = vpop.xlane.xlu0 %752
    %v754 = vsel %vm266, %v719, 0.0
    %755 = vadd.xlane.f32.xlu0 %v754
    %v756 = vpop.xlane.xlu0 %755
    %v757 = vsel %vm266, %v721, 0.0
    %758 = vadd.xlane.f32.xlu0 %v757
    %v759 = vpop.xlane.xlu0 %758
    %v760 = vsel %vm266, %v723, 0.0
    %761 = vadd.xlane.f32.xlu0 %v760
    %v762 = vpop.xlane.xlu0 %761
    %v763 = vsel %vm266, %v725, 0.0
    %764 = vadd.xlane.f32.xlu0 %v763
    %v765 = vpop.xlane.xlu0 %764
    %v766 = vsel %vm266, %v727, 0.0
    %767 = vadd.xlane.f32.xlu0 %v766
    %v768 = vpop.xlane.xlu0 %767
    %v769 = vsel %vm266, %v729, 0.0
    %770 = vadd.xlane.f32.xlu0 %v769
    %v771 = vpop.xlane.xlu0 %770
    %v772 = vsel %vm266, %v731, 0.0
    %773 = vadd.xlane.f32.xlu0 %v772
    %v774 = vpop.xlane.xlu0 %773
    %v775 = vsel %vm266, %v733, 0.0
    %776 = vadd.xlane.f32.xlu0 %v775
    %v777 = vpop.xlane.xlu0 %776
    %v778 = vsel %vm266, %v735, 0.0
    %779 = vadd.xlane.f32.xlu0 %v778
    %v780 = vpop.xlane.xlu0 %779
    %v781 = vsel %vm266, %v737, 0.0
    %782 = vadd.xlane.f32.xlu0 %v781
    %v783 = vpop.xlane.xlu0 %782
    %v784 = vsel %vm266, %v739, 0.0
    %785 = vadd.xlane.f32.xlu0 %v784
    %v786 = vpop.xlane.xlu0 %785
    %v787 = vsel %vm266, %v741, 0.0
    %788 = vadd.xlane.f32.xlu0 %v787
    %v789 = vpop.xlane.xlu0 %788
    %v790 = vrcp.pop %v744
    %v791 = vrcp.pop %v747
    %v792 = vrcp.pop %v750
    %v793 = vrcp.pop %v753
    %v794 = vrcp.pop %v756
    %v795 = vrcp.pop %v759
    %v796 = vrcp.pop %v762
    %v797 = vrcp.pop %v765
    %v798 = vrcp.pop %v768
    %v799 = vrcp.pop %v771
    %v800 = vrcp.pop %v774
    %v801 = vrcp.pop %v777
    %v802 = vrcp.pop %v780
    %v803 = vrcp.pop %v783
    %v804 = vrcp.pop %v786
    %v805 = vrcp.pop %v789
    %v806 = vmul.f32 %v711, %v790
    %v807 = vmul.f32 %v713, %v791
    %v808 = vmul.f32 %v715, %v792
    %v809 = vmul.f32 %v717, %v793
    %v810 = vmul.f32 %v719, %v794
    %v811 = vmul.f32 %v721, %v795
    %v812 = vmul.f32 %v723, %v796
    %v813 = vmul.f32 %v725, %v797
    %v814 = vmul.f32 %v727, %v798
    %v815 = vmul.f32 %v729, %v799
    %v816 = vmul.f32 %v731, %v800
    %v817 = vmul.f32 %v733, %v801
    %v818 = vmul.f32 %v735, %v802
    %v819 = vmul.f32 %v737, %v803
    %v820 = vmul.f32 %v739, %v804
    %v821 = vmul.f32 %v741, %v805
    %v822 = vpack.c.bf16 %v806, %v806
    %v823 = vpack.c.bf16 %v807, %v807
    %v824 = vpack.c.bf16 %v808, %v808
    %v825 = vpack.c.bf16 %v809, %v809
    %v826 = vpack.c.bf16 %v810, %v810
    %v827 = vpack.c.bf16 %v811, %v811
    %v828 = vpack.c.bf16 %v812, %v812
    %v829 = vpack.c.bf16 %v813, %v813
    %v830 = vpack.c.bf16 %v814, %v814
    %v831 = vpack.c.bf16 %v815, %v815
    %v832 = vpack.c.bf16 %v816, %v816
    %v833 = vpack.c.bf16 %v817, %v817
    %v834 = vpack.c.bf16 %v818, %v818
    %v835 = vpack.c.bf16 %v819, %v819
    %v836 = vpack.c.bf16 %v820, %v820
    %v837 = vpack.c.bf16 %v821, %v821
    %838 = vrot.lane.b32.xlu0 %v263, 64
    %v839 = vpop.permute.xlu0 %838
    %v841 = vsel %vm266, %v822, 0
    %vm843 = vcmask 1043456
    %v845 = vsel %vm843, %v839, 0
    %847 = vmatpush.bf16.msra.mxu0 0
    %848 = vmatpush.bf16.msra.mxu0 0
    %849 = vmatpush.bf16.msra.mxu0 0
    %850 = vmatpush.bf16.msra.mxu0 0
    %851 = vmatpush.bf16.msra.mxu0 0
    %852 = vmatpush.bf16.msra.mxu0 0
    %853 = vmatpush.bf16.msra.mxu0 0
    %854 = vmatpush.bf16.msra.mxu0 %v845
    %855 = vmatmul.bf16.gmra.mxu0 %v841
    %v856 = vpop.f32.mrf.mxu0
    %v857 = vadd.f32 0.0, %v856
    %v858 = vpop.f32.mrf.mxu0
    %859 = vdwg.mxu0
    %860 = vrot.lane.b32.xlu0 %v288, 64
    %v861 = vpop.permute.xlu0 %860
    %v863 = vsel %vm266, %v823, 0
    %v866 = vsel %vm843, %v861, 0
    %868 = vmatpush.bf16.msra.mxu0 0
    %869 = vmatpush.bf16.msra.mxu0 0
    %870 = vmatpush.bf16.msra.mxu0 0
    %871 = vmatpush.bf16.msra.mxu0 0
    %872 = vmatpush.bf16.msra.mxu0 0
    %873 = vmatpush.bf16.msra.mxu0 0
    %874 = vmatpush.bf16.msra.mxu0 0
    %875 = vmatpush.bf16.msra.mxu0 %v866
    %876 = vmatmul.bf16.gmra.mxu0 %v863
    %v877 = vpop.f32.mrf.mxu0
    %v878 = vadd.f32 0.0, %v877
    %v879 = vpop.f32.mrf.mxu0
    %880 = vdwg.mxu0
    %881 = vrot.lane.b32.xlu0 %v312, 64
    %v882 = vpop.permute.xlu0 %881
    %v884 = vsel %vm266, %v824, 0
    %v887 = vsel %vm843, %v882, 0
    %889 = vmatpush.bf16.msra.mxu0 0
    %890 = vmatpush.bf16.msra.mxu0 0
    %891 = vmatpush.bf16.msra.mxu0 0
    %892 = vmatpush.bf16.msra.mxu0 0
    %893 = vmatpush.bf16.msra.mxu0 0
    %894 = vmatpush.bf16.msra.mxu0 0
    %895 = vmatpush.bf16.msra.mxu0 0
    %896 = vmatpush.bf16.msra.mxu0 %v887
    %897 = vmatmul.bf16.gmra.mxu0 %v884
    %v898 = vpop.f32.mrf.mxu0
    %v899 = vadd.f32 0.0, %v898
    %v900 = vpop.f32.mrf.mxu0
    %901 = vdwg.mxu0
    %902 = vrot.lane.b32.xlu0 %v336, 64
    %v903 = vpop.permute.xlu0 %902
    %v905 = vsel %vm266, %v825, 0
    %v908 = vsel %vm843, %v903, 0
    %910 = vmatpush.bf16.msra.mxu0 0
    %911 = vmatpush.bf16.msra.mxu0 0
    %912 = vmatpush.bf16.msra.mxu0 0
    %913 = vmatpush.bf16.msra.mxu0 0
    %914 = vmatpush.bf16.msra.mxu0 0
    %915 = vmatpush.bf16.msra.mxu0 0
    %916 = vmatpush.bf16.msra.mxu0 0
    %917 = vmatpush.bf16.msra.mxu0 %v908
    %918 = vmatmul.bf16.gmra.mxu0 %v905
    %v919 = vpop.f32.mrf.mxu0
    %v920 = vadd.f32 0.0, %v919
    %v921 = vpop.f32.mrf.mxu0
    %922 = vdwg.mxu0
    %923 = vrot.lane.b32.xlu0 %v360, 64
    %v924 = vpop.permute.xlu0 %923
    %v926 = vsel %vm266, %v826, 0
    %v929 = vsel %vm843, %v924, 0
    %931 = vmatpush.bf16.msra.mxu0 0
    %932 = vmatpush.bf16.msra.mxu0 0
    %933 = vmatpush.bf16.msra.mxu0 0
    %934 = vmatpush.bf16.msra.mxu0 0
    %935 = vmatpush.bf16.msra.mxu0 0
    %936 = vmatpush.bf16.msra.mxu0 0
    %937 = vmatpush.bf16.msra.mxu0 0
    %938 = vmatpush.bf16.msra.mxu0 %v929
    %939 = vmatmul.bf16.gmra.mxu0 %v926
    %v940 = vpop.f32.mrf.mxu0
    %v941 = vadd.f32 0.0, %v940
    %v942 = vpop.f32.mrf.mxu0
    %943 = vdwg.mxu0
    %944 = vrot.lane.b32.xlu0 %v384, 64
    %v945 = vpop.permute.xlu0 %944
    %v947 = vsel %vm266, %v827, 0
    %v950 = vsel %vm843, %v945, 0
    %952 = vmatpush.bf16.msra.mxu0 0
    %953 = vmatpush.bf16.msra.mxu0 0
    %954 = vmatpush.bf16.msra.mxu0 0
    %955 = vmatpush.bf16.msra.mxu0 0
    %956 = vmatpush.bf16.msra.mxu0 0
    %957 = vmatpush.bf16.msra.mxu0 0
    %958 = vmatpush.bf16.msra.mxu0 0
    %959 = vmatpush.bf16.msra.mxu0 %v950
    %960 = vmatmul.bf16.gmra.mxu0 %v947
    %v961 = vpop.f32.mrf.mxu0
    %v962 = vadd.f32 0.0, %v961
    %v963 = vpop.f32.mrf.mxu0
    %964 = vdwg.mxu0
    %965 = vrot.lane.b32.xlu0 %v408, 64
    %v966 = vpop.permute.xlu0 %965
    %v968 = vsel %vm266, %v828, 0
    %v971 = vsel %vm843, %v966, 0
    %973 = vmatpush.bf16.msra.mxu0 0
    %974 = vmatpush.bf16.msra.mxu0 0
    %975 = vmatpush.bf16.msra.mxu0 0
    %976 = vmatpush.bf16.msra.mxu0 0
    %977 = vmatpush.bf16.msra.mxu0 0
    %978 = vmatpush.bf16.msra.mxu0 0
    %979 = vmatpush.bf16.msra.mxu0 0
    %980 = vmatpush.bf16.msra.mxu0 %v971
    %981 = vmatmul.bf16.gmra.mxu0 %v968
    %v982 = vpop.f32.mrf.mxu0
    %v983 = vadd.f32 0.0, %v982
    %v984 = vpop.f32.mrf.mxu0
    %985 = vdwg.mxu0
    %986 = vrot.lane.b32.xlu0 %v432, 64
    %v987 = vpop.permute.xlu0 %986
    %v989 = vsel %vm266, %v829, 0
    %v992 = vsel %vm843, %v987, 0
    %994 = vmatpush.bf16.msra.mxu0 0
    %995 = vmatpush.bf16.msra.mxu0 0
    %996 = vmatpush.bf16.msra.mxu0 0
    %997 = vmatpush.bf16.msra.mxu0 0
    %998 = vmatpush.bf16.msra.mxu0 0
    %999 = vmatpush.bf16.msra.mxu0 0
    %1000 = vmatpush.bf16.msra.mxu0 0
    %1001 = vmatpush.bf16.msra.mxu0 %v992
    %1002 = vmatmul.bf16.gmra.mxu0 %v989
    %v1003 = vpop.f32.mrf.mxu0
    %v1004 = vadd.f32 0.0, %v1003
    %v1005 = vpop.f32.mrf.mxu0
    %1006 = vdwg.mxu0
    %1007 = vrot.lane.b32.xlu0 %v456, 64
    %v1008 = vpop.permute.xlu0 %1007
    %v1010 = vsel %vm266, %v830, 0
    %v1013 = vsel %vm843, %v1008, 0
    %1015 = vmatpush.bf16.msra.mxu0 0
    %1016 = vmatpush.bf16.msra.mxu0 0
    %1017 = vmatpush.bf16.msra.mxu0 0
    %1018 = vmatpush.bf16.msra.mxu0 0
    %1019 = vmatpush.bf16.msra.mxu0 0
    %1020 = vmatpush.bf16.msra.mxu0 0
    %1021 = vmatpush.bf16.msra.mxu0 0
    %1022 = vmatpush.bf16.msra.mxu0 %v1013
    %1023 = vmatmul.bf16.gmra.mxu0 %v1010
    %v1024 = vpop.f32.mrf.mxu0
    %v1025 = vadd.f32 0.0, %v1024
    %v1026 = vpop.f32.mrf.mxu0
    %1027 = vdwg.mxu0
    %1028 = vrot.lane.b32.xlu0 %v480, 64
    %v1029 = vpop.permute.xlu0 %1028
    %v1031 = vsel %vm266, %v831, 0
    %v1034 = vsel %vm843, %v1029, 0
    %1036 = vmatpush.bf16.msra.mxu0 0
    %1037 = vmatpush.bf16.msra.mxu0 0
    %1038 = vmatpush.bf16.msra.mxu0 0
    %1039 = vmatpush.bf16.msra.mxu0 0
    %1040 = vmatpush.bf16.msra.mxu0 0
    %1041 = vmatpush.bf16.msra.mxu0 0
    %1042 = vmatpush.bf16.msra.mxu0 0
    %1043 = vmatpush.bf16.msra.mxu0 %v1034
    %1044 = vmatmul.bf16.gmra.mxu0 %v1031
    %v1045 = vpop.f32.mrf.mxu0
    %v1046 = vadd.f32 0.0, %v1045
    %v1047 = vpop.f32.mrf.mxu0
    %1048 = vdwg.mxu0
    %1049 = vrot.lane.b32.xlu0 %v504, 64
    %v1050 = vpop.permute.xlu0 %1049
    %v1052 = vsel %vm266, %v832, 0
    %v1055 = vsel %vm843, %v1050, 0
    %1057 = vmatpush.bf16.msra.mxu0 0
    %1058 = vmatpush.bf16.msra.mxu0 0
    %1059 = vmatpush.bf16.msra.mxu0 0
    %1060 = vmatpush.bf16.msra.mxu0 0
    %1061 = vmatpush.bf16.msra.mxu0 0
    %1062 = vmatpush.bf16.msra.mxu0 0
    %1063 = vmatpush.bf16.msra.mxu0 0
    %1064 = vmatpush.bf16.msra.mxu0 %v1055
    %1065 = vmatmul.bf16.gmra.mxu0 %v1052
    %v1066 = vpop.f32.mrf.mxu0
    %v1067 = vadd.f32 0.0, %v1066
    %v1068 = vpop.f32.mrf.mxu0
    %1069 = vdwg.mxu0
    %1070 = vrot.lane.b32.xlu0 %v528, 64
    %v1071 = vpop.permute.xlu0 %1070
    %v1073 = vsel %vm266, %v833, 0
    %v1076 = vsel %vm843, %v1071, 0
    %1078 = vmatpush.bf16.msra.mxu0 0
    %1079 = vmatpush.bf16.msra.mxu0 0
    %1080 = vmatpush.bf16.msra.mxu0 0
    %1081 = vmatpush.bf16.msra.mxu0 0
    %1082 = vmatpush.bf16.msra.mxu0 0
    %1083 = vmatpush.bf16.msra.mxu0 0
    %1084 = vmatpush.bf16.msra.mxu0 0
    %1085 = vmatpush.bf16.msra.mxu0 %v1076
    %1086 = vmatmul.bf16.gmra.mxu0 %v1073
    %v1087 = vpop.f32.mrf.mxu0
    %v1088 = vadd.f32 0.0, %v1087
    %v1089 = vpop.f32.mrf.mxu0
    %1090 = vdwg.mxu0
    %1091 = vrot.lane.b32.xlu0 %v552, 64
    %v1092 = vpop.permute.xlu0 %1091
    %v1094 = vsel %vm266, %v834, 0
    %v1097 = vsel %vm843, %v1092, 0
    %1099 = vmatpush.bf16.msra.mxu0 0
    %1100 = vmatpush.bf16.msra.mxu0 0
    %1101 = vmatpush.bf16.msra.mxu0 0
    %1102 = vmatpush.bf16.msra.mxu0 0
    %1103 = vmatpush.bf16.msra.mxu0 0
    %1104 = vmatpush.bf16.msra.mxu0 0
    %1105 = vmatpush.bf16.msra.mxu0 0
    %1106 = vmatpush.bf16.msra.mxu0 %v1097
    %1107 = vmatmul.bf16.gmra.mxu0 %v1094
    %v1108 = vpop.f32.mrf.mxu0
    %v1109 = vadd.f32 0.0, %v1108
    %v1110 = vpop.f32.mrf.mxu0
    %1111 = vdwg.mxu0
    %1112 = vrot.lane.b32.xlu0 %v576, 64
    %v1113 = vpop.permute.xlu0 %1112
    %v1115 = vsel %vm266, %v835, 0
    %v1118 = vsel %vm843, %v1113, 0
    %1120 = vmatpush.bf16.msra.mxu0 0
    %1121 = vmatpush.bf16.msra.mxu0 0
    %1122 = vmatpush.bf16.msra.mxu0 0
    %1123 = vmatpush.bf16.msra.mxu0 0
    %1124 = vmatpush.bf16.msra.mxu0 0
    %1125 = vmatpush.bf16.msra.mxu0 0
    %1126 = vmatpush.bf16.msra.mxu0 0
    %1127 = vmatpush.bf16.msra.mxu0 %v1118
    %1128 = vmatmul.bf16.gmra.mxu0 %v1115
    %v1129 = vpop.f32.mrf.mxu0
    %v1130 = vadd.f32 0.0, %v1129
    %v1131 = vpop.f32.mrf.mxu0
    %1132 = vdwg.mxu0
    %1133 = vrot.lane.b32.xlu0 %v600, 64
    %v1134 = vpop.permute.xlu0 %1133
    %v1136 = vsel %vm266, %v836, 0
    %v1139 = vsel %vm843, %v1134, 0
    %1141 = vmatpush.bf16.msra.mxu0 0
    %1142 = vmatpush.bf16.msra.mxu0 0
    %1143 = vmatpush.bf16.msra.mxu0 0
    %1144 = vmatpush.bf16.msra.mxu0 0
    %1145 = vmatpush.bf16.msra.mxu0 0
    %1146 = vmatpush.bf16.msra.mxu0 0
    %1147 = vmatpush.bf16.msra.mxu0 0
    %1148 = vmatpush.bf16.msra.mxu0 %v1139
    %1149 = vmatmul.bf16.gmra.mxu0 %v1136
    %v1150 = vpop.f32.mrf.mxu0
    %v1151 = vadd.f32 0.0, %v1150
    %v1152 = vpop.f32.mrf.mxu0
    %1153 = vdwg.mxu0
    %1154 = vrot.lane.b32.xlu0 %v624, 64
    %v1155 = vpop.permute.xlu0 %1154
    %v1157 = vsel %vm266, %v837, 0
    %v1160 = vsel %vm843, %v1155, 0
    %1162 = vmatpush.bf16.msra.mxu0 0
    %1163 = vmatpush.bf16.msra.mxu0 0
    %1164 = vmatpush.bf16.msra.mxu0 0
    %1165 = vmatpush.bf16.msra.mxu0 0
    %1166 = vmatpush.bf16.msra.mxu0 0
    %1167 = vmatpush.bf16.msra.mxu0 0
    %1168 = vmatpush.bf16.msra.mxu0 0
    %1169 = vmatpush.bf16.msra.mxu0 %v1160
    %1170 = vmatmul.bf16.gmra.mxu0 %v1157
    %v1171 = vpop.f32.mrf.mxu0
    %v1172 = vadd.f32 0.0, %v1171
    %v1173 = vpop.f32.mrf.mxu0
    %1174 = vdwg.mxu0
    %1179 = vrot.lane.b32.xlu0 %v941, 8
    %v1180 = vpop.permute.xlu0 %1179
    %1181 = vrot.lane.b32.xlu0 %v962, 8
    %v1182 = vpop.permute.xlu0 %1181
    %1183 = vrot.lane.b32.xlu0 %v983, 8
    %v1184 = vpop.permute.xlu0 %1183
    %1185 = vrot.lane.b32.xlu0 %v1004, 8
    %v1186 = vpop.permute.xlu0 %1185
    %1195 = vrot.lane.b32.xlu0 %v1025, 16
    %v1196 = vpop.permute.xlu0 %1195
    %1197 = vrot.lane.b32.xlu0 %v1046, 16
    %v1198 = vpop.permute.xlu0 %1197
    %1199 = vrot.lane.b32.xlu0 %v1067, 16
    %v1200 = vpop.permute.xlu0 %1199
    %1201 = vrot.lane.b32.xlu0 %v1088, 16
    %v1202 = vpop.permute.xlu0 %1201
    %1211 = vrot.lane.b32.xlu0 %v1109, 24
    %v1212 = vpop.permute.xlu0 %1211
    %1213 = vrot.lane.b32.xlu0 %v1130, 24
    %v1214 = vpop.permute.xlu0 %1213
    %1215 = vrot.lane.b32.xlu0 %v1151, 24
    %v1216 = vpop.permute.xlu0 %1215
    %1217 = vrot.lane.b32.xlu0 %v1172, 24
    %v1218 = vpop.permute.xlu0 %1217
    %v1223 = vsel %vm266, %v857, %v1180
    %v1224 = vsel %vm266, %v878, %v1182
    %v1225 = vsel %vm266, %v899, %v1184
    %v1226 = vsel %vm266, %v920, %v1186
    %vm1227 = vcmask 130048
    %v1228 = vsel %vm1227, %v1223, %v1196
    %v1229 = vsel %vm1227, %v1224, %v1198
    %v1230 = vsel %vm1227, %v1225, %v1200
    %v1231 = vsel %vm1227, %v1226, %v1202
    %vm1232 = vcmask 195584
    %v1233 = vsel %vm1232, %v1228, %v1212
    %v1234 = vsel %vm1232, %v1229, %v1214
    %v1235 = vsel %vm1232, %v1230, %v1216
    %v1236 = vsel %vm1232, %v1231, %v1218
    %v1237 = vpack.c.bf16 %v1234, %v1233
    %v1238 = vpack.c.bf16 %v1236, %v1235
    %v1239 = vld [vmem:[%s7] sm:$0xf]
    %v1240 = vld [vmem:[%s7 + $0x4] sm:$0xf]
    %v1241 = vld [vmem:[%s7 + $0x8] sm:$0xf]
    %v1242 = vld [vmem:[%s7 + $0xc] sm:$0xf]
    %v1243 = vld [vmem:[%s8] sm:$0x1]
    %v1245 = vperm.slane %v1243, 0
    %v1251 = vunpack.c.l.b16 %v1239
    %v1252 = vunpack.c.l.b16 %v1240
    %v1253 = vunpack.c.l.b16 %v1241
    %v1254 = vunpack.c.l.b16 %v1242
    %v1255 = vpack.c.b16 %v1252, %v1251
    %v1256 = vpack.c.b16 %v1254, %v1253
    %v1260 = vsel %vm135, %v1237, 0
    %v1263 = vsel %vm135, %v1238, 0
    %1265 = vmatpush.bf16.msra.mxu0 0
    %1266 = vmatpush.bf16.msra.mxu0 0
    %1267 = vmatpush.bf16.msra.mxu0 0
    %1268 = vmatpush.bf16.msra.mxu0 0
    %1269 = vmatpush.bf16.msra.mxu0 0
    %1270 = vmatpush.bf16.msra.mxu0 0
    %1271 = vmatpush.bf16.msra.mxu0 %v1256
    %1272 = vmatpush.bf16.msra.mxu0 %v1255
    %1273 = vmatmul.bf16.gmra.mxu0 %v1260
    %v1274 = vpop.f32.mrf.mxu0
    %v1275 = vadd.f32 %v1245, %v1274
    %v1276 = vpop.f32.mrf.mxu0
    %v1277 = vadd.f32 %v1245, %v1276
    %1278 = vmatmul.bf16.gmra.mxu0 %v1263
    %v1279 = vpop.f32.mrf.mxu0
    %v1280 = vadd.f32 %v1245, %v1279
    %v1281 = vpop.f32.mrf.mxu0
    %v1282 = vadd.f32 %v1245, %v1281
    %1283 = vdwg.mxu0
    %v1284 = vadd.f32 %v1275, %v105
    %v1285 = vadd.f32 %v1277, %v106
    %v1286 = vadd.f32 %v1280, %v109
    %v1287 = vadd.f32 %v1282, %v110
    %v1288 = vld [vmem:[%s9] sm:$0x1]
    %v1289 = vld [vmem:[%s10] sm:$0x1]
    %v1290 = vsel %vm135, %v1284, 0.0
    %1291 = vadd.xlane.f32.xlu0 %v1290
    %v1292 = vpop.xlane.xlu0 %1291
    %v1293 = vsel %vm135, %v1285, 0.0
    %1294 = vadd.xlane.f32.xlu0 %v1293
    %v1295 = vpop.xlane.xlu0 %1294
    %v1296 = vsel %vm135, %v1286, 0.0
    %1297 = vadd.xlane.f32.xlu0 %v1296
    %v1298 = vpop.xlane.xlu0 %1297
    %v1299 = vsel %vm135, %v1287, 0.0
    %1300 = vadd.xlane.f32.xlu0 %v1299
    %v1301 = vpop.xlane.xlu0 %1300
    %v1302 = vrcp.pop 32.0
    %v1303 = vmul.f32 32.0, %v1302
    %v1304 = vsub.f32 1.0, %v1303
    %v1305 = vmul.f32 %v1302, %v1304
    %v1306 = vadd.f32 %v1302, %v1305
    %vm1307 = vweird.f32 %v1302
    %v1308 = vsel %vm1307, %v1302, %v1306
    %v1309 = vmul.f32 %v1292, %v1308
    %v1310 = vmul.f32 %v1295, %v1308
    %v1311 = vmul.f32 %v1298, %v1308
    %v1312 = vmul.f32 %v1301, %v1308
    %v1313 = vsub.f32 %v1284, %v1309
    %v1314 = vsub.f32 %v1285, %v1310
    %v1315 = vsub.f32 %v1286, %v1311
    %v1316 = vsub.f32 %v1287, %v1312
    %v1317 = vmul.f32 %v1313, %v1313
    %v1318 = vmul.f32 %v1314, %v1314
    %v1319 = vmul.f32 %v1315, %v1315
    %v1320 = vmul.f32 %v1316, %v1316
    %v1321 = vsel %vm135, %v1317, 0.0
    %1322 = vadd.xlane.f32.xlu0 %v1321
    %v1323 = vpop.xlane.xlu0 %1322
    %v1324 = vsel %vm135, %v1318, 0.0
    %1325 = vadd.xlane.f32.xlu0 %v1324
    %v1326 = vpop.xlane.xlu0 %1325
    %v1327 = vsel %vm135, %v1319, 0.0
    %1328 = vadd.xlane.f32.xlu0 %v1327
    %v1329 = vpop.xlane.xlu0 %1328
    %v1330 = vsel %vm135, %v1320, 0.0
    %1331 = vadd.xlane.f32.xlu0 %v1330
    %v1332 = vpop.xlane.xlu0 %1331
    %v1333 = vmul.f32 %v1323, %v1308
    %v1334 = vmul.f32 %v1326, %v1308
    %v1335 = vmul.f32 %v1329, %v1308
    %v1336 = vmul.f32 %v1332, %v1308
    %v1337 = vadd.f32 %v1333, 1e-12
    %v1338 = vadd.f32 %v1334, 1e-12
    %v1339 = vadd.f32 %v1335, 1e-12
    %v1340 = vadd.f32 %v1336, 1e-12
    %v1341 = vrsqrt.pop %v1337
    %v1342 = vmul.f32 %v1341, %v1337
    %v1343 = vmul.f32 %v1342, %v1341
    %v1344 = vmul.f32 0.5, %v1343
    %v1345 = vsub.f32 1.5, %v1344
    %v1346 = vmul.f32 %v1341, %v1345
    %vm1347 = vweird.f32 %v1337
    %vm1348 = vweird.f32 %v1341
    %vm1349 = vmor %vm1347, %vm1348
    %v1350 = vsel %vm1349, %v1341, %v1346
    %v1351 = vrsqrt.pop %v1338
    %v1352 = vmul.f32 %v1351, %v1338
    %v1353 = vmul.f32 %v1352, %v1351
    %v1354 = vmul.f32 0.5, %v1353
    %v1355 = vsub.f32 1.5, %v1354
    %v1356 = vmul.f32 %v1351, %v1355
    %vm1357 = vweird.f32 %v1338
    %vm1358 = vweird.f32 %v1351
    %vm1359 = vmor %vm1357, %vm1358
    %v1360 = vsel %vm1359, %v1351, %v1356
    %v1361 = vrsqrt.pop %v1339
    %v1362 = vmul.f32 %v1361, %v1339
    %v1363 = vmul.f32 %v1362, %v1361
    %v1364 = vmul.f32 0.5, %v1363
    %v1365 = vsub.f32 1.5, %v1364
    %v1366 = vmul.f32 %v1361, %v1365
    %vm1367 = vweird.f32 %v1339
    %vm1368 = vweird.f32 %v1361
    %vm1369 = vmor %vm1367, %vm1368
    %v1370 = vsel %vm1369, %v1361, %v1366
    %v1371 = vrsqrt.pop %v1340
    %v1372 = vmul.f32 %v1371, %v1340
    %v1373 = vmul.f32 %v1372, %v1371
    %v1374 = vmul.f32 0.5, %v1373
    %v1375 = vsub.f32 1.5, %v1374
    %v1376 = vmul.f32 %v1371, %v1375
    %vm1377 = vweird.f32 %v1340
    %vm1378 = vweird.f32 %v1371
    %vm1379 = vmor %vm1377, %vm1378
    %v1380 = vsel %vm1379, %v1371, %v1376
    %v1381 = vmul.f32 %v1313, %v1350
    %v1382 = vmul.f32 %v1314, %v1360
    %v1383 = vmul.f32 %v1315, %v1370
    %v1384 = vmul.f32 %v1316, %v1380
    %v1386 = vperm.slane %v1288, 0
    %v1388 = vmul.f32 %v1381, %v1386
    %v1389 = vmul.f32 %v1382, %v1386
    %v1390 = vmul.f32 %v1383, %v1386
    %v1391 = vmul.f32 %v1384, %v1386
    %v1393 = vperm.slane %v1289, 0
    %v1395 = vadd.f32 %v1388, %v1393
    %v1396 = vadd.f32 %v1389, %v1393
    %v1397 = vadd.f32 %v1390, %v1393
    %v1398 = vadd.f32 %v1391, %v1393
    %v1399 = vpack.c.bf16 %v1396, %v1395
    %v1400 = vpack.c.bf16 %v1398, %v1397
    %v1401 = vld [vmem:[%s11] sm:$0xf]
    %v1402 = vld [vmem:[%s11 + $0x4] sm:$0xf]
    %v1403 = vld [vmem:[%s11 + $0x8] sm:$0xf]
    %v1404 = vld [vmem:[%s11 + $0xc] sm:$0xf]
    %v1405 = vld [vmem:[%s12] sm:$0x1]
    %v1407 = vperm.slane %v1405, 0
    %v1413 = vunpack.c.l.b16 %v1401
    %v1414 = vunpack.c.l.b16 %v1402
    %v1415 = vunpack.c.l.b16 %v1403
    %v1416 = vunpack.c.l.b16 %v1404
    %v1417 = vpack.c.b16 %v1414, %v1413
    %v1418 = vpack.c.b16 %v1416, %v1415
    %v1422 = vsel %vm135, %v1399, 0
    %v1425 = vsel %vm135, %v1400, 0
    %1427 = vmatpush.bf16.msra.mxu0 0
    %1428 = vmatpush.bf16.msra.mxu0 0
    %1429 = vmatpush.bf16.msra.mxu0 0
    %1430 = vmatpush.bf16.msra.mxu0 0
    %1431 = vmatpush.bf16.msra.mxu0 0
    %1432 = vmatpush.bf16.msra.mxu0 0
    %1433 = vmatpush.bf16.msra.mxu0 %v1418
    %1434 = vmatpush.bf16.msra.mxu0 %v1417
    %1435 = vmatmul.bf16.gmra.mxu0 %v1422
    %v1436 = vpop.f32.mrf.mxu0
    %v1437 = vadd.f32 %v1407, %v1436
    %v1438 = vpop.f32.mrf.mxu0
    %v1439 = vadd.f32 %v1407, %v1438
    %1440 = vmatmul.bf16.gmra.mxu0 %v1425
    %v1441 = vpop.f32.mrf.mxu0
    %v1442 = vadd.f32 %v1407, %v1441
    %v1443 = vpop.f32.mrf.mxu0
    %v1444 = vadd.f32 %v1407, %v1443
    %1445 = vdwg.mxu0
    %v1446 = vmul.f32 %v1437, 0.5
    %v1447 = vmul.f32 %v1439, 0.5
    %v1448 = vmul.f32 %v1442, 0.5
    %v1449 = vmul.f32 %v1444, 0.5
    %v1450 = vmul.f32 %v1437, 0.044715
    %v1451 = vmul.f32 %v1439, 0.044715
    %v1452 = vmul.f32 %v1442, 0.044715
    %v1453 = vmul.f32 %v1444, 0.044715
    %v1454 = vmul.f32 %v1450, %v1437
    %v1455 = vmul.f32 %v1451, %v1439
    %v1456 = vmul.f32 %v1452, %v1442
    %v1457 = vmul.f32 %v1453, %v1444
    %v1458 = vmul.f32 %v1454, %v1437
    %v1459 = vmul.f32 %v1455, %v1439
    %v1460 = vmul.f32 %v1456, %v1442
    %v1461 = vmul.f32 %v1457, %v1444
    %v1462 = vadd.f32 %v1437, %v1458
    %v1463 = vadd.f32 %v1439, %v1459
    %v1464 = vadd.f32 %v1442, %v1460
    %v1465 = vadd.f32 %v1444, %v1461
    %v1466 = vmul.f32 %v1462, 0.7978846
    %v1467 = vmul.f32 %v1463, 0.7978846
    %v1468 = vmul.f32 %v1464, 0.7978846
    %v1469 = vmul.f32 %v1465, 0.7978846
    %v1470 = vtanh.pop %v1466
    %v1471 = vtanh.pop %v1467
    %v1472 = vtanh.pop %v1468
    %v1473 = vtanh.pop %v1469
    %v1474 = vadd.f32 %v1470, 1.0
    %v1475 = vadd.f32 %v1471, 1.0
    %v1476 = vadd.f32 %v1472, 1.0
    %v1477 = vadd.f32 %v1473, 1.0
    %v1478 = vmul.f32 %v1446, %v1474
    %v1479 = vmul.f32 %v1447, %v1475
    %v1480 = vmul.f32 %v1448, %v1476
    %v1481 = vmul.f32 %v1449, %v1477
    %v1482 = vpack.c.bf16 %v1479, %v1478
    %v1483 = vpack.c.bf16 %v1481, %v1480
    %v1484 = vld [vmem:[%s13] sm:$0xf]
    %v1485 = vld [vmem:[%s13 + $0x4] sm:$0xf]
    %v1486 = vld [vmem:[%s13 + $0x8] sm:$0xf]
    %v1487 = vld [vmem:[%s13 + $0xc] sm:$0xf]
    %v1488 = vld [vmem:[%s13 + $0x10] sm:$0xf]
    %v1489 = vld [vmem:[%s13 + $0x14] sm:$0xf]
    %v1490 = vld [vmem:[%s13 + $0x18] sm:$0xf]
    %v1491 = vld [vmem:[%s13 + $0x1c] sm:$0xf]
    %v1492 = vld [vmem:[%s14] sm:$0x1]
    %v1494 = vperm.slane %v1492, 0
    %v1504 = vunpack.c.l.b16 %v1484
    %v1505 = vunpack.c.l.b16 %v1485
    %v1506 = vunpack.c.l.b16 %v1486
    %v1507 = vunpack.c.l.b16 %v1487
    %v1508 = vunpack.c.l.b16 %v1488
    %v1509 = vunpack.c.l.b16 %v1489
    %v1510 = vunpack.c.l.b16 %v1490
    %v1511 = vunpack.c.l.b16 %v1491
    %v1512 = vpack.c.b16 %v1505, %v1504
    %v1513 = vpack.c.b16 %v1507, %v1506
    %v1514 = vpack.c.b16 %v1509, %v1508
    %v1515 = vpack.c.b16 %v1511, %v1510
    %vm1520 = vcmask 523264
    %v1522 = vsel %vm1520, %v1482, 0
    %v1525 = vsel %vm1520, %v1483, 0
    %1527 = vmatpush.bf16.msra.mxu0 0
    %1528 = vmatpush.bf16.msra.mxu0 0
    %1529 = vmatpush.bf16.msra.mxu0 0
    %1530 = vmatpush.bf16.msra.mxu0 0
    %1531 = vmatpush.bf16.msra.mxu0 %v1515
    %1532 = vmatpush.bf16.msra.mxu0 %v1514
    %1533 = vmatpush.bf16.msra.mxu0 %v1513
    %1534 = vmatpush.bf16.msra.mxu0 %v1512
    %1535 = vmatmul.bf16.gmra.mxu0 %v1522
    %v1536 = vpop.f32.mrf.mxu0
    %v1537 = vadd.f32 %v1494, %v1536
    %v1538 = vpop.f32.mrf.mxu0
    %v1539 = vadd.f32 %v1494, %v1538
    %1540 = vmatmul.bf16.gmra.mxu0 %v1525
    %v1541 = vpop.f32.mrf.mxu0
    %v1542 = vadd.f32 %v1494, %v1541
    %v1543 = vpop.f32.mrf.mxu0
    %v1544 = vadd.f32 %v1494, %v1543
    %1545 = vdwg.mxu0
    %v1546 = vadd.f32 %v1537, %v1395
    %v1547 = vadd.f32 %v1539, %v1396
    %v1548 = vadd.f32 %v1542, %v1397
    %v1549 = vadd.f32 %v1544, %v1398
    %v1550 = vld [vmem:[#allocation7] sm:$0x1]
    %v1551 = vld [vmem:[%s16] sm:$0x1]
    %v1552 = vsel %vm135, %v1546, 0.0
    %1553 = vadd.xlane.f32.xlu0 %v1552
    %v1554 = vpop.xlane.xlu0 %1553
    %v1555 = vsel %vm135, %v1547, 0.0
    %1556 = vadd.xlane.f32.xlu0 %v1555
    %v1557 = vpop.xlane.xlu0 %1556
    %v1558 = vsel %vm135, %v1548, 0.0
    %1559 = vadd.xlane.f32.xlu0 %v1558
    %v1560 = vpop.xlane.xlu0 %1559
    %v1561 = vsel %vm135, %v1549, 0.0
    %1562 = vadd.xlane.f32.xlu0 %v1561
    %v1563 = vpop.xlane.xlu0 %1562
    %v1564 = vmul.f32 %v1554, %v1308
    %v1565 = vmul.f32 %v1557, %v1308
    %v1566 = vmul.f32 %v1560, %v1308
    %v1567 = vmul.f32 %v1563, %v1308
    %v1568 = vsub.f32 %v1546, %v1564
    %v1569 = vsub.f32 %v1547, %v1565
    %v1570 = vsub.f32 %v1548, %v1566
    %v1571 = vsub.f32 %v1549, %v1567
    %v1572 = vmul.f32 %v1568, %v1568
    %v1573 = vmul.f32 %v1569, %v1569
    %v1574 = vmul.f32 %v1570, %v1570
    %v1575 = vmul.f32 %v1571, %v1571
    %v1576 = vsel %vm135, %v1572, 0.0
    %1577 = vadd.xlane.f32.xlu0 %v1576
    %v1578 = vpop.xlane.xlu0 %1577
    %v1579 = vsel %vm135, %v1573, 0.0
    %1580 = vadd.xlane.f32.xlu0 %v1579
    %v1581 = vpop.xlane.xlu0 %1580
    %v1582 = vsel %vm135, %v1574, 0.0
    %1583 = vadd.xlane.f32.xlu0 %v1582
    %v1584 = vpop.xlane.xlu0 %1583
    %v1585 = vsel %vm135, %v1575, 0.0
    %1586 = vadd.xlane.f32.xlu0 %v1585
    %v1587 = vpop.xlane.xlu0 %1586
    %v1588 = vmul.f32 %v1578, %v1308
    %v1589 = vmul.f32 %v1581, %v1308
    %v1590 = vmul.f32 %v1584, %v1308
    %v1591 = vmul.f32 %v1587, %v1308
    %v1592 = vadd.f32 %v1588, 1e-12
    %v1593 = vadd.f32 %v1589, 1e-12
    %v1594 = vadd.f32 %v1590, 1e-12
    %v1595 = vadd.f32 %v1591, 1e-12
    %v1596 = vrsqrt.pop %v1592
    %v1597 = vmul.f32 %v1596, %v1592
    %v1598 = vmul.f32 %v1597, %v1596
    %v1599 = vmul.f32 0.5, %v1598
    %v1600 = vsub.f32 1.5, %v1599
    %v1601 = vmul.f32 %v1596, %v1600
    %vm1602 = vweird.f32 %v1592
    %vm1603 = vweird.f32 %v1596
    %vm1604 = vmor %vm1602, %vm1603
    %v1605 = vsel %vm1604, %v1596, %v1601
    %v1606 = vrsqrt.pop %v1593
    %v1607 = vmul.f32 %v1606, %v1593
    %v1608 = vmul.f32 %v1607, %v1606
    %v1609 = vmul.f32 0.5, %v1608
    %v1610 = vsub.f32 1.5, %v1609
    %v1611 = vmul.f32 %v1606, %v1610
    %vm1612 = vweird.f32 %v1593
    %vm1613 = vweird.f32 %v1606
    %vm1614 = vmor %vm1612, %vm1613
    %v1615 = vsel %vm1614, %v1606, %v1611
    %v1616 = vrsqrt.pop %v1594
    %v1617 = vmul.f32 %v1616, %v1594
    %v1618 = vmul.f32 %v1617, %v1616
    %v1619 = vmul.f32 0.5, %v1618
    %v1620 = vsub.f32 1.5, %v1619
    %v1621 = vmul.f32 %v1616, %v1620
    %vm1622 = vweird.f32 %v1594
    %vm1623 = vweird.f32 %v1616
    %vm1624 = vmor %vm1622, %vm1623
    %v1625 = vsel %vm1624, %v1616, %v1621
    %v1626 = vrsqrt.pop %v1595
    %v1627 = vmul.f32 %v1626, %v1595
    %v1628 = vmul.f32 %v1627, %v1626
    %v1629 = vmul.f32 0.5, %v1628
    %v1630 = vsub.f32 1.5, %v1629
    %v1631 = vmul.f32 %v1626, %v1630
    %vm1632 = vweird.f32 %v1595
    %vm1633 = vweird.f32 %v1626
    %vm1634 = vmor %vm1632, %vm1633
    %v1635 = vsel %vm1634, %v1626, %v1631
    %v1636 = vmul.f32 %v1568, %v1605
    %v1637 = vmul.f32 %v1569, %v1615
    %v1638 = vmul.f32 %v1570, %v1625
    %v1639 = vmul.f32 %v1571, %v1635
    %v1641 = vperm.slane %v1550, 0
    %v1643 = vmul.f32 %v1636, %v1641
    %v1644 = vmul.f32 %v1637, %v1641
    %v1645 = vmul.f32 %v1638, %v1641
    %v1646 = vmul.f32 %v1639, %v1641
    %v1648 = vperm.slane %v1551, 0
    %v1650 = vadd.f32 %v1643, %v1648
    %v1651 = vadd.f32 %v1644, %v1648
    %v1652 = vadd.f32 %v1645, %v1648
    %v1653 = vadd.f32 %v1646, %v1648
    %v1654 = vld [vmem:[%s2] sm:$0x1]
    %v1655 = vld [vmem:[%s2 + $0x1] sm:$0x1]
    %v1658 = vperm.slane %v1654, 0
    %v1659 = vperm.slane %v1655, 0
    %1660 = vset.pattern.permute.xlu0 0
    %1661 = vperm.xlu0 %1660, %v1658
    %v1662 = vpop.permute.xlu0 %1661
    %1664 = vset.pattern.permute.xlu0 0
    %1665 = vperm.xlu0 %1664, %v1659
    %v1666 = vpop.permute.xlu0 %1665
    %v1668 = vmul.f32 %v1662, %v1650
    %v1669 = vmul.f32 %v1666, %v1651
    %v1670 = vsub.f32 1.0, %v1654
    %v1671 = vsub.f32 1.0, %v1655
    %v1674 = vperm.slane %v1670, 0
    %v1675 = vperm.slane %v1671, 0
    %1676 = vset.pattern.permute.xlu0 0
    %1677 = vperm.xlu0 %1676, %v1674
    %v1678 = vpop.permute.xlu0 %1677
    %1680 = vset.pattern.permute.xlu0 0
    %1681 = vperm.xlu0 %1680, %v1675
    %v1682 = vpop.permute.xlu0 %1681
    %v1684 = vmul.f32 %v1678, %v1652
    %v1685 = vmul.f32 %v1682, %v1653
    %v1686 = vadd.f32 %v1668, %v1684
    %v1687 = vadd.f32 %v1669, %v1685
    %v1688 = vpack.c.bf16 %v1687, %v1686
    %s1689 = scalar_lea.vmem %s5, 16
    %v1690 = vld [vmem:[%s1689] sm:$0xf]
    %v1691 = vld [vmem:[%s1689 + $0x4] sm:$0xf]
    %v1692 = vld [vmem:[%s1689 + $0x8] sm:$0xf]
    %v1693 = vld [vmem:[%s1689 + $0xc] sm:$0xf]
    %s1694 = scalar_lea.vmem %s6, 1
    %v1695 = vld [vmem:[%s1694] sm:$0x1]
    %v1697 = vperm.slane %v1695, 0
    %v1703 = vunpack.c.l.b16 %v1690
    %v1704 = vunpack.c.l.b16 %v1691
    %v1705 = vunpack.c.l.b16 %v1692
    %v1706 = vunpack.c.l.b16 %v1693
    %v1707 = vpack.c.b16 %v1704, %v1703
    %v1708 = vpack.c.b16 %v1706, %v1705
    %v1712 = vsel %vm135, %v1688, 0
    %1714 = vmatpush.bf16.msra.mxu0 0
    %1715 = vmatpush.bf16.msra.mxu0 0
    %1716 = vmatpush.bf16.msra.mxu0 0
    %1717 = vmatpush.bf16.msra.mxu0 0
    %1718 = vmatpush.bf16.msra.mxu0 0
    %1719 = vmatpush.bf16.msra.mxu0 0
    %1720 = vmatpush.bf16.msra.mxu0 %v1708
    %1721 = vmatpush.bf16.msra.mxu0 %v1707
    %1722 = vmatmul.bf16.gmra.mxu0 %v1712
    %v1723 = vpop.f32.mrf.mxu0
    %v1724 = vadd.f32 %v1697, %v1723
    %v1725 = vpop.f32.mrf.mxu0
    %v1726 = vadd.f32 %v1697, %v1725
    %1727 = vdwg.mxu0
    %1730 = vrot.lane.b32.xlu0 %v1724, 120
    %v1731 = vpop.permute.xlu0 %1730
    %1732 = vrot.lane.b32.xlu0 %v1726, 120
    %v1733 = vpop.permute.xlu0 %1732
    %1736 = vrot.lane.b32.xlu0 %v1724, 112
    %v1737 = vpop.permute.xlu0 %1736
    %1738 = vrot.lane.b32.xlu0 %v1726, 112
    %v1739 = vpop.permute.xlu0 %1738
    %1742 = vrot.lane.b32.xlu0 %v1724, 104
    %v1743 = vpop.permute.xlu0 %1742
    %1744 = vrot.lane.b32.xlu0 %v1726, 104
    %v1745 = vpop.permute.xlu0 %1744
    %v1748 = vmul.f32 %v1724, 0.35355338
    %v1749 = vmul.f32 %v1726, 0.35355338
    %v1750 = vmul.f32 %v1731, 0.35355338
    %v1751 = vmul.f32 %v1733, 0.35355338
    %v1752 = vmul.f32 %v1737, 0.35355338
    %v1753 = vmul.f32 %v1739, 0.35355338
    %v1754 = vmul.f32 %v1743, 0.35355338
    %v1755 = vmul.f32 %v1745, 0.35355338
    %v1756 = vpack.c.bf16 %v1748, %v1748
    %v1757 = vpack.c.bf16 %v1749, %v1749
    %v1758 = vpack.c.bf16 %v1750, %v1750
    %v1759 = vpack.c.bf16 %v1751, %v1751
    %v1760 = vpack.c.bf16 %v1752, %v1752
    %v1761 = vpack.c.bf16 %v1753, %v1753
    %v1762 = vpack.c.bf16 %v1754, %v1754
    %v1763 = vpack.c.bf16 %v1755, %v1755
    %v1764 = vpack.c.bf16 %v1724, %v1724
    %v1765 = vpack.c.bf16 %v1726, %v1726
    %v1766 = vpack.c.bf16 %v1731, %v1731
    %v1767 = vpack.c.bf16 %v1733, %v1733
    %v1768 = vpack.c.bf16 %v1737, %v1737
    %v1769 = vpack.c.bf16 %v1739, %v1739
    %v1770 = vpack.c.bf16 %v1743, %v1743
    %v1771 = vpack.c.bf16 %v1745, %v1745
    %v1773 = vunpack.c.l.b16 %v1764
    %v1774 = vpack.c.b16 %v1773, %v1773
    %1775 = vrot.lane.b32.xlu0 %v1774, 96
    %v1776 = vpop.permute.xlu0 %1775
    %v1778 = vsel %vm266, %v1756, 0
    %v1781 = vsel %vm266, %v1776, 0
    %1783 = vmatpush.bf16.xpose.msra.mxu0 0
    %1784 = vmatpush.bf16.xpose.msra.mxu0 0
    %1785 = vmatpush.bf16.xpose.msra.mxu0 0
    %1786 = vmatpush.bf16.xpose.msra.mxu0 0
    %1787 = vmatpush.bf16.xpose.msra.mxu0 0
    %1788 = vmatpush.bf16.xpose.msra.mxu0 0
    %1789 = vmatpush.bf16.xpose.msra.mxu0 0
    %1790 = vmatpush.bf16.xpose.msra.mxu0 %v1781
    %1791 = vmatmul.bf16.gmra.mxu0 %v1778
    %v1792 = vpop.f32.mrf.mxu0
    %v1793 = vadd.f32 %v253, %v1792
    %v1794 = vpop.f32.mrf.mxu0
    %1795 = vdwg.mxu0
    %v1797 = vunpack.c.l.b16 %v1765
    %v1798 = vpack.c.b16 %v1797, %v1797
    %1799 = vrot.lane.b32.xlu0 %v1798, 96
    %v1800 = vpop.permute.xlu0 %1799
    %v1802 = vsel %vm266, %v1757, 0
    %v1805 = vsel %vm266, %v1800, 0
    %1807 = vmatpush.bf16.xpose.msra.mxu0 0
    %1808 = vmatpush.bf16.xpose.msra.mxu0 0
    %1809 = vmatpush.bf16.xpose.msra.mxu0 0
    %1810 = vmatpush.bf16.xpose.msra.mxu0 0
    %1811 = vmatpush.bf16.xpose.msra.mxu0 0
    %1812 = vmatpush.bf16.xpose.msra.mxu0 0
    %1813 = vmatpush.bf16.xpose.msra.mxu0 0
    %1814 = vmatpush.bf16.xpose.msra.mxu0 %v1805
    %1815 = vmatmul.bf16.gmra.mxu0 %v1802
    %v1816 = vpop.f32.mrf.mxu0
    %v1817 = vadd.f32 %v254, %v1816
    %v1818 = vpop.f32.mrf.mxu0
    %1819 = vdwg.mxu0
    %v1821 = vunpack.c.l.b16 %v1766
    %v1822 = vpack.c.b16 %v1821, %v1821
    %1823 = vrot.lane.b32.xlu0 %v1822, 96
    %v1824 = vpop.permute.xlu0 %1823
    %v1826 = vsel %vm266, %v1758, 0
    %v1829 = vsel %vm266, %v1824, 0
    %1831 = vmatpush.bf16.xpose.msra.mxu0 0
    %1832 = vmatpush.bf16.xpose.msra.mxu0 0
    %1833 = vmatpush.bf16.xpose.msra.mxu0 0
    %1834 = vmatpush.bf16.xpose.msra.mxu0 0
    %1835 = vmatpush.bf16.xpose.msra.mxu0 0
    %1836 = vmatpush.bf16.xpose.msra.mxu0 0
    %1837 = vmatpush.bf16.xpose.msra.mxu0 0
    %1838 = vmatpush.bf16.xpose.msra.mxu0 %v1829
    %1839 = vmatmul.bf16.gmra.mxu0 %v1826
    %v1840 = vpop.f32.mrf.mxu0
    %v1841 = vadd.f32 %v253, %v1840
    %v1842 = vpop.f32.mrf.mxu0
    %1843 = vdwg.mxu0
    %v1845 = vunpack.c.l.b16 %v1767
    %v1846 = vpack.c.b16 %v1845, %v1845
    %1847 = vrot.lane.b32.xlu0 %v1846, 96
    %v1848 = vpop.permute.xlu0 %1847
    %v1850 = vsel %vm266, %v1759, 0
    %v1853 = vsel %vm266, %v1848, 0
    %1855 = vmatpush.bf16.xpose.msra.mxu0 0
    %1856 = vmatpush.bf16.xpose.msra.mxu0 0
    %1857 = vmatpush.bf16.xpose.msra.mxu0 0
    %1858 = vmatpush.bf16.xpose.msra.mxu0 0
    %1859 = vmatpush.bf16.xpose.msra.mxu0 0
    %1860 = vmatpush.bf16.xpose.msra.mxu0 0
    %1861 = vmatpush.bf16.xpose.msra.mxu0 0
    %1862 = vmatpush.bf16.xpose.msra.mxu0 %v1853
    %1863 = vmatmul.bf16.gmra.mxu0 %v1850
    %v1864 = vpop.f32.mrf.mxu0
    %v1865 = vadd.f32 %v254, %v1864
    %v1866 = vpop.f32.mrf.mxu0
    %1867 = vdwg.mxu0
    %v1869 = vunpack.c.l.b16 %v1768
    %v1870 = vpack.c.b16 %v1869, %v1869
    %1871 = vrot.lane.b32.xlu0 %v1870, 96
    %v1872 = vpop.permute.xlu0 %1871
    %v1874 = vsel %vm266, %v1760, 0
    %v1877 = vsel %vm266, %v1872, 0
    %1879 = vmatpush.bf16.xpose.msra.mxu0 0
    %1880 = vmatpush.bf16.xpose.msra.mxu0 0
    %1881 = vmatpush.bf16.xpose.msra.mxu0 0
    %1882 = vmatpush.bf16.xpose.msra.mxu0 0
    %1883 = vmatpush.bf16.xpose.msra.mxu0 0
    %1884 = vmatpush.bf16.xpose.msra.mxu0 0
    %1885 = vmatpush.bf16.xpose.msra.mxu0 0
    %1886 = vmatpush.bf16.xpose.msra.mxu0 %v1877
    %1887 = vmatmul.bf16.gmra.mxu0 %v1874
    %v1888 = vpop.f32.mrf.mxu0
    %v1889 = vadd.f32 %v253, %v1888
    %v1890 = vpop.f32.mrf.mxu0
    %1891 = vdwg.mxu0
    %v1893 = vunpack.c.l.b16 %v1769
    %v1894 = vpack.c.b16 %v1893, %v1893
    %1895 = vrot.lane.b32.xlu0 %v1894, 96
    %v1896 = vpop.permute.xlu0 %1895
    %v1898 = vsel %vm266, %v1761, 0
    %v1901 = vsel %vm266, %v1896, 0
    %1903 = vmatpush.bf16.xpose.msra.mxu0 0
    %1904 = vmatpush.bf16.xpose.msra.mxu0 0
    %1905 = vmatpush.bf16.xpose.msra.mxu0 0
    %1906 = vmatpush.bf16.xpose.msra.mxu0 0
    %1907 = vmatpush.bf16.xpose.msra.mxu0 0
    %1908 = vmatpush.bf16.xpose.msra.mxu0 0
    %1909 = vmatpush.bf16.xpose.msra.mxu0 0
    %1910 = vmatpush.bf16.xpose.msra.mxu0 %v1901
    %1911 = vmatmul.bf16.gmra.mxu0 %v1898
    %v1912 = vpop.f32.mrf.mxu0
    %v1913 = vadd.f32 %v254, %v1912
    %v1914 = vpop.f32.mrf.mxu0
    %1915 = vdwg.mxu0
    %v1917 = vunpack.c.l.b16 %v1770
    %v1918 = vpack.c.b16 %v1917, %v1917
    %1919 = vrot.lane.b32.xlu0 %v1918, 96
    %v1920 = vpop.permute.xlu0 %1919
    %v1922 = vsel %vm266, %v1762, 0
    %v1925 = vsel %vm266, %v1920, 0
    %1927 = vmatpush.bf16.xpose.msra.mxu0 0
    %1928 = vmatpush.bf16.xpose.msra.mxu0 0
    %1929 = vmatpush.bf16.xpose.msra.mxu0 0
    %1930 = vmatpush.bf16.xpose.msra.mxu0 0
    %1931 = vmatpush.bf16.xpose.msra.mxu0 0
    %1932 = vmatpush.bf16.xpose.msra.mxu0 0
    %1933 = vmatpush.bf16.xpose.msra.mxu0 0
    %1934 = vmatpush.bf16.xpose.msra.mxu0 %v1925
    %1935 = vmatmul.bf16.gmra.mxu0 %v1922
    %v1936 = vpop.f32.mrf.mxu0
    %v1937 = vadd.f32 %v253, %v1936
    %v1938 = vpop.f32.mrf.mxu0
    %1939 = vdwg.mxu0
    %v1941 = vunpack.c.l.b16 %v1771
    %v1942 = vpack.c.b16 %v1941, %v1941
    %1943 = vrot.lane.b32.xlu0 %v1942, 96
    %v1944 = vpop.permute.xlu0 %1943
    %v1946 = vsel %vm266, %v1763, 0
    %v1949 = vsel %vm266, %v1944, 0
    %1951 = vmatpush.bf16.xpose.msra.mxu0 0
    %1952 = vmatpush.bf16.xpose.msra.mxu0 0
    %1953 = vmatpush.bf16.xpose.msra.mxu0 0
    %1954 = vmatpush.bf16.xpose.msra.mxu0 0
    %1955 = vmatpush.bf16.xpose.msra.mxu0 0
    %1956 = vmatpush.bf16.xpose.msra.mxu0 0
    %1957 = vmatpush.bf16.xpose.msra.mxu0 0
    %1958 = vmatpush.bf16.xpose.msra.mxu0 %v1949
    %1959 = vmatmul.bf16.gmra.mxu0 %v1946
    %v1960 = vpop.f32.mrf.mxu0
    %v1961 = vadd.f32 %v254, %v1960
    %v1962 = vpop.f32.mrf.mxu0
    %1963 = vdwg.mxu0
    %v1964 = vsel %vm266, %v1793, -inf
    %1965 = vmax.xlane.f32.xlu0 %v1964
    %v1966 = vpop.xlane.xlu0 %1965
    %v1967 = vsel %vm266, %v1817, -inf
    %1968 = vmax.xlane.f32.xlu0 %v1967
    %v1969 = vpop.xlane.xlu0 %1968
    %v1970 = vsel %vm266, %v1841, -inf
    %1971 = vmax.xlane.f32.xlu0 %v1970
    %v1972 = vpop.xlane.xlu0 %1971
    %v1973 = vsel %vm266, %v1865, -inf
    %1974 = vmax.xlane.f32.xlu0 %v1973
    %v1975 = vpop.xlane.xlu0 %1974
    %v1976 = vsel %vm266, %v1889, -inf
    %1977 = vmax.xlane.f32.xlu0 %v1976
    %v1978 = vpop.xlane.xlu0 %1977
    %v1979 = vsel %vm266, %v1913, -inf
    %1980 = vmax.xlane.f32.xlu0 %v1979
    %v1981 = vpop.xlane.xlu0 %1980
    %v1982 = vsel %vm266, %v1937, -inf
    %1983 = vmax.xlane.f32.xlu0 %v1982
    %v1984 = vpop.xlane.xlu0 %1983
    %v1985 = vsel %vm266, %v1961, -inf
    %1986 = vmax.xlane.f32.xlu0 %v1985
    %v1987 = vpop.xlane.xlu0 %1986
    %v1988 = vsub.f32 %v1793, %v1966
    %v1989 = vsub.f32 %v1817, %v1969
    %v1990 = vsub.f32 %v1841, %v1972
    %v1991 = vsub.f32 %v1865, %v1975
    %v1992 = vsub.f32 %v1889, %v1978
    %v1993 = vsub.f32 %v1913, %v1981
    %v1994 = vsub.f32 %v1937, %v1984
    %v1995 = vsub.f32 %v1961, %v1987
    %v1996 = vmul.f32 %v1988, 1.442695
    %v1997 = vpow.pop %v1996
    %v1998 = vmul.f32 %v1989, 1.442695
    %v1999 = vpow.pop %v1998
    %v2000 = vmul.f32 %v1990, 1.442695
    %v2001 = vpow.pop %v2000
    %v2002 = vmul.f32 %v1991, 1.442695
    %v2003 = vpow.pop %v2002
    %v2004 = vmul.f32 %v1992, 1.442695
    %v2005 = vpow.pop %v2004
    %v2006 = vmul.f32 %v1993, 1.442695
    %v2007 = vpow.pop %v2006
    %v2008 = vmul.f32 %v1994, 1.442695
    %v2009 = vpow.pop %v2008
    %v2010 = vmul.f32 %v1995, 1.442695
    %v2011 = vpow.pop %v2010
    %v2012 = vsel %vm266, %v1997, 0.0
    %2013 = vadd.xlane.f32.xlu0 %v2012
    %v2014 = vpop.xlane.xlu0 %2013
    %v2015 = vsel %vm266, %v1999, 0.0
    %2016 = vadd.xlane.f32.xlu0 %v2015
    %v2017 = vpop.xlane.xlu0 %2016
    %v2018 = vsel %vm266, %v2001, 0.0
    %2019 = vadd.xlane.f32.xlu0 %v2018
    %v2020 = vpop.xlane.xlu0 %2019
    %v2021 = vsel %vm266, %v2003, 0.0
    %2022 = vadd.xlane.f32.xlu0 %v2021
    %v2023 = vpop.xlane.xlu0 %2022
    %v2024 = vsel %vm266, %v2005, 0.0
    %2025 = vadd.xlane.f32.xlu0 %v2024
    %v2026 = vpop.xlane.xlu0 %2025
    %v2027 = vsel %vm266, %v2007, 0.0
    %2028 = vadd.xlane.f32.xlu0 %v2027
    %v2029 = vpop.xlane.xlu0 %2028
    %v2030 = vsel %vm266, %v2009, 0.0
    %2031 = vadd.xlane.f32.xlu0 %v2030
    %v2032 = vpop.xlane.xlu0 %2031
    %v2033 = vsel %vm266, %v2011, 0.0
    %2034 = vadd.xlane.f32.xlu0 %v2033
    %v2035 = vpop.xlane.xlu0 %2034
    %v2036 = vrcp.pop %v2014
    %v2037 = vrcp.pop %v2017
    %v2038 = vrcp.pop %v2020
    %v2039 = vrcp.pop %v2023
    %v2040 = vrcp.pop %v2026
    %v2041 = vrcp.pop %v2029
    %v2042 = vrcp.pop %v2032
    %v2043 = vrcp.pop %v2035
    %v2044 = vmul.f32 %v1997, %v2036
    %v2045 = vmul.f32 %v1999, %v2037
    %v2046 = vmul.f32 %v2001, %v2038
    %v2047 = vmul.f32 %v2003, %v2039
    %v2048 = vmul.f32 %v2005, %v2040
    %v2049 = vmul.f32 %v2007, %v2041
    %v2050 = vmul.f32 %v2009, %v2042
    %v2051 = vmul.f32 %v2011, %v2043
    %v2052 = vpack.c.bf16 %v2044, %v2044
    %v2053 = vpack.c.bf16 %v2045, %v2045
    %v2054 = vpack.c.bf16 %v2046, %v2046
    %v2055 = vpack.c.bf16 %v2047, %v2047
    %v2056 = vpack.c.bf16 %v2048, %v2048
    %v2057 = vpack.c.bf16 %v2049, %v2049
    %v2058 = vpack.c.bf16 %v2050, %v2050
    %v2059 = vpack.c.bf16 %v2051, %v2051
    %2060 = vrot.lane.b32.xlu0 %v1774, 64
    %v2061 = vpop.permute.xlu0 %2060
    %v2063 = vsel %vm266, %v2052, 0
    %v2066 = vsel %vm843, %v2061, 0
    %2068 = vmatpush.bf16.msra.mxu0 0
    %2069 = vmatpush.bf16.msra.mxu0 0
    %2070 = vmatpush.bf16.msra.mxu0 0
    %2071 = vmatpush.bf16.msra.mxu0 0
    %2072 = vmatpush.bf16.msra.mxu0 0
    %2073 = vmatpush.bf16.msra.mxu0 0
    %2074 = vmatpush.bf16.msra.mxu0 0
    %2075 = vmatpush.bf16.msra.mxu0 %v2066
    %2076 = vmatmul.bf16.gmra.mxu0 %v2063
    %v2077 = vpop.f32.mrf.mxu0
    %v2078 = vadd.f32 0.0, %v2077
    %v2079 = vpop.f32.mrf.mxu0
    %2080 = vdwg.mxu0
    %2081 = vrot.lane.b32.xlu0 %v1798, 64
    %v2082 = vpop.permute.xlu0 %2081
    %v2084 = vsel %vm266, %v2053, 0
    %v2087 = vsel %vm843, %v2082, 0
    %2089 = vmatpush.bf16.msra.mxu0 0
    %2090 = vmatpush.bf16.msra.mxu0 0
    %2091 = vmatpush.bf16.msra.mxu0 0
    %2092 = vmatpush.bf16.msra.mxu0 0
    %2093 = vmatpush.bf16.msra.mxu0 0
    %2094 = vmatpush.bf16.msra.mxu0 0
    %2095 = vmatpush.bf16.msra.mxu0 0
    %2096 = vmatpush.bf16.msra.mxu0 %v2087
    %2097 = vmatmul.bf16.gmra.mxu0 %v2084
    %v2098 = vpop.f32.mrf.mxu0
    %v2099 = vadd.f32 0.0, %v2098
    %v2100 = vpop.f32.mrf.mxu0
    %2101 = vdwg.mxu0
    %2102 = vrot.lane.b32.xlu0 %v1822, 64
    %v2103 = vpop.permute.xlu0 %2102
    %v2105 = vsel %vm266, %v2054, 0
    %v2108 = vsel %vm843, %v2103, 0
    %2110 = vmatpush.bf16.msra.mxu0 0
    %2111 = vmatpush.bf16.msra.mxu0 0
    %2112 = vmatpush.bf16.msra.mxu0 0
    %2113 = vmatpush.bf16.msra.mxu0 0
    %2114 = vmatpush.bf16.msra.mxu0 0
    %2115 = vmatpush.bf16.msra.mxu0 0
    %2116 = vmatpush.bf16.msra.mxu0 0
    %2117 = vmatpush.bf16.msra.mxu0 %v2108
    %2118 = vmatmul.bf16.gmra.mxu0 %v2105
    %v2119 = vpop.f32.mrf.mxu0
    %v2120 = vadd.f32 0.0, %v2119
    %v2121 = vpop.f32.mrf.mxu0
    %2122 = vdwg.mxu0
    %2123 = vrot.lane.b32.xlu0 %v1846, 64
    %v2124 = vpop.permute.xlu0 %2123
    %v2126 = vsel %vm266, %v2055, 0
    %v2129 = vsel %vm843, %v2124, 0
    %2131 = vmatpush.bf16.msra.mxu0 0
    %2132 = vmatpush.bf16.msra.mxu0 0
    %2133 = vmatpush.bf16.msra.mxu0 0
    %2134 = vmatpush.bf16.msra.mxu0 0
    %2135 = vmatpush.bf16.msra.mxu0 0
    %2136 = vmatpush.bf16.msra.mxu0 0
    %2137 = vmatpush.bf16.msra.mxu0 0
    %2138 = vmatpush.bf16.msra.mxu0 %v2129
    %2139 = vmatmul.bf16.gmra.mxu0 %v2126
    %v2140 = vpop.f32.mrf.mxu0
    %v2141 = vadd.f32 0.0, %v2140
    %v2142 = vpop.f32.mrf.mxu0
    %2143 = vdwg.mxu0
    %2144 = vrot.lane.b32.xlu0 %v1870, 64
    %v2145 = vpop.permute.xlu0 %2144
    %v2147 = vsel %vm266, %v2056, 0
    %v2150 = vsel %vm843, %v2145, 0
    %2152 = vmatpush.bf16.msra.mxu0 0
    %2153 = vmatpush.bf16.msra.mxu0 0
    %2154 = vmatpush.bf16.msra.mxu0 0
    %2155 = vmatpush.bf16.msra.mxu0 0
    %2156 = vmatpush.bf16.msra.mxu0 0
    %2157 = vmatpush.bf16.msra.mxu0 0
    %2158 = vmatpush.bf16.msra.mxu0 0
    %2159 = vmatpush.bf16.msra.mxu0 %v2150
    %2160 = vmatmul.bf16.gmra.mxu0 %v2147
    %v2161 = vpop.f32.mrf.mxu0
    %v2162 = vadd.f32 0.0, %v2161
    %v2163 = vpop.f32.mrf.mxu0
    %2164 = vdwg.mxu0
    %2165 = vrot.lane.b32.xlu0 %v1894, 64
    %v2166 = vpop.permute.xlu0 %2165
    %v2168 = vsel %vm266, %v2057, 0
    %v2171 = vsel %vm843, %v2166, 0
    %2173 = vmatpush.bf16.msra.mxu0 0
    %2174 = vmatpush.bf16.msra.mxu0 0
    %2175 = vmatpush.bf16.msra.mxu0 0
    %2176 = vmatpush.bf16.msra.mxu0 0
    %2177 = vmatpush.bf16.msra.mxu0 0
    %2178 = vmatpush.bf16.msra.mxu0 0
    %2179 = vmatpush.bf16.msra.mxu0 0
    %2180 = vmatpush.bf16.msra.mxu0 %v2171
    %2181 = vmatmul.bf16.gmra.mxu0 %v2168
    %v2182 = vpop.f32.mrf.mxu0
    %v2183 = vadd.f32 0.0, %v2182
    %v2184 = vpop.f32.mrf.mxu0
    %2185 = vdwg.mxu0
    %2186 = vrot.lane.b32.xlu0 %v1918, 64
    %v2187 = vpop.permute.xlu0 %2186
    %v2189 = vsel %vm266, %v2058, 0
    %v2192 = vsel %vm843, %v2187, 0
    %2194 = vmatpush.bf16.msra.mxu0 0
    %2195 = vmatpush.bf16.msra.mxu0 0
    %2196 = vmatpush.bf16.msra.mxu0 0
    %2197 = vmatpush.bf16.msra.mxu0 0
    %2198 = vmatpush.bf16.msra.mxu0 0
    %2199 = vmatpush.bf16.msra.mxu0 0
    %2200 = vmatpush.bf16.msra.mxu0 0
    %2201 = vmatpush.bf16.msra.mxu0 %v2192
    %2202 = vmatmul.bf16.gmra.mxu0 %v2189
    %v2203 = vpop.f32.mrf.mxu0
    %v2204 = vadd.f32 0.0, %v2203
    %v2205 = vpop.f32.mrf.mxu0
    %2206 = vdwg.mxu0
    %2207 = vrot.lane.b32.xlu0 %v1942, 64
    %v2208 = vpop.permute.xlu0 %2207
    %v2210 = vsel %vm266, %v2059, 0
    %v2213 = vsel %vm843, %v2208, 0
    %2215 = vmatpush.bf16.msra.mxu0 0
    %2216 = vmatpush.bf16.msra.mxu0 0
    %2217 = vmatpush.bf16.msra.mxu0 0
    %2218 = vmatpush.bf16.msra.mxu0 0
    %2219 = vmatpush.bf16.msra.mxu0 0
    %2220 = vmatpush.bf16.msra.mxu0 0
    %2221 = vmatpush.bf16.msra.mxu0 0
    %2222 = vmatpush.bf16.msra.mxu0 %v2213
    %2223 = vmatmul.bf16.gmra.mxu0 %v2210
    %v2224 = vpop.f32.mrf.mxu0
    %v2225 = vadd.f32 0.0, %v2224
    %v2226 = vpop.f32.mrf.mxu0
    %2227 = vdwg.mxu0
    %2230 = vrot.lane.b32.xlu0 %v2120, 8
    %v2231 = vpop.permute.xlu0 %2230
    %2232 = vrot.lane.b32.xlu0 %v2141, 8
    %v2233 = vpop.permute.xlu0 %2232
    %2238 = vrot.lane.b32.xlu0 %v2162, 16
    %v2239 = vpop.permute.xlu0 %2238
    %2240 = vrot.lane.b32.xlu0 %v2183, 16
    %v2241 = vpop.permute.xlu0 %2240
    %2246 = vrot.lane.b32.xlu0 %v2204, 24
    %v2247 = vpop.permute.xlu0 %2246
    %2248 = vrot.lane.b32.xlu0 %v2225, 24
    %v2249 = vpop.permute.xlu0 %2248
    %v2252 = vsel %vm266, %v2078, %v2231
    %v2253 = vsel %vm266, %v2099, %v2233
    %v2254 = vsel %vm1227, %v2252, %v2239
    %v2255 = vsel %vm1227, %v2253, %v2241
    %v2256 = vsel %vm1232, %v2254, %v2247
    %v2257 = vsel %vm1232, %v2255, %v2249
    %v2258 = vpack.c.bf16 %v2257, %v2256
    %s2259 = scalar_lea.vmem %s7, 16
    %v2260 = vld [vmem:[%s2259] sm:$0xf]
    %v2261 = vld [vmem:[%s2259 + $0x4] sm:$0xf]
    %v2262 = vld [vmem:[%s2259 + $0x8] sm:$0xf]
    %v2263 = vld [vmem:[%s2259 + $0xc] sm:$0xf]
    %s2264 = scalar_lea.vmem %s8, 1
    %v2265 = vld [vmem:[%s2264] sm:$0x1]
    %v2267 = vperm.slane %v2265, 0
    %v2273 = vunpack.c.l.b16 %v2260
    %v2274 = vunpack.c.l.b16 %v2261
    %v2275 = vunpack.c.l.b16 %v2262
    %v2276 = vunpack.c.l.b16 %v2263
    %v2277 = vpack.c.b16 %v2274, %v2273
    %v2278 = vpack.c.b16 %v2276, %v2275
    %v2282 = vsel %vm135, %v2258, 0
    %2284 = vmatpush.bf16.msra.mxu0 0
    %2285 = vmatpush.bf16.msra.mxu0 0
    %2286 = vmatpush.bf16.msra.mxu0 0
    %2287 = vmatpush.bf16.msra.mxu0 0
    %2288 = vmatpush.bf16.msra.mxu0 0
    %2289 = vmatpush.bf16.msra.mxu0 0
    %2290 = vmatpush.bf16.msra.mxu0 %v2278
    %2291 = vmatpush.bf16.msra.mxu0 %v2277
    %2292 = vmatmul.bf16.gmra.mxu0 %v2282
    %v2293 = vpop.f32.mrf.mxu0
    %v2294 = vadd.f32 %v2267, %v2293
    %v2295 = vpop.f32.mrf.mxu0
    %v2296 = vadd.f32 %v2267, %v2295
    %2297 = vdwg.mxu0
    %v2298 = vadd.f32 %v2294, %v1686
    %v2299 = vadd.f32 %v2296, %v1687
    %s2300 = scalar_lea.vmem %s9, 1
    %v2301 = vld [vmem:[%s2300] sm:$0x1]
    %s2302 = scalar_lea.vmem %s10, 1
    %v2303 = vld [vmem:[%s2302] sm:$0x1]
    %v2304 = vsel %vm135, %v2298, 0.0
    %2305 = vadd.xlane.f32.xlu0 %v2304
    %v2306 = vpop.xlane.xlu0 %2305
    %v2307 = vsel %vm135, %v2299, 0.0
    %2308 = vadd.xlane.f32.xlu0 %v2307
    %v2309 = vpop.xlane.xlu0 %2308
    %v2310 = vmul.f32 %v2306, %v1308
    %v2311 = vmul.f32 %v2309, %v1308
    %v2312 = vsub.f32 %v2298, %v2310
    %v2313 = vsub.f32 %v2299, %v2311
    %v2314 = vmul.f32 %v2312, %v2312
    %v2315 = vmul.f32 %v2313, %v2313
    %v2316 = vsel %vm135, %v2314, 0.0
    %2317 = vadd.xlane.f32.xlu0 %v2316
    %v2318 = vpop.xlane.xlu0 %2317
    %v2319 = vsel %vm135, %v2315, 0.0
    %2320 = vadd.xlane.f32.xlu0 %v2319
    %v2321 = vpop.xlane.xlu0 %2320
    %v2322 = vmul.f32 %v2318, %v1308
    %v2323 = vmul.f32 %v2321, %v1308
    %v2324 = vadd.f32 %v2322, 1e-12
    %v2325 = vadd.f32 %v2323, 1e-12
    %v2326 = vrsqrt.pop %v2324
    %v2327 = vmul.f32 %v2326, %v2324
    %v2328 = vmul.f32 %v2327, %v2326
    %v2329 = vmul.f32 0.5, %v2328
    %v2330 = vsub.f32 1.5, %v2329
    %v2331 = vmul.f32 %v2326, %v2330
    %vm2332 = vweird.f32 %v2324
    %vm2333 = vweird.f32 %v2326
    %vm2334 = vmor %vm2332, %vm2333
    %v2335 = vsel %vm2334, %v2326, %v2331
    %v2336 = vrsqrt.pop %v2325
    %v2337 = vmul.f32 %v2336, %v2325
    %v2338 = vmul.f32 %v2337, %v2336
    %v2339 = vmul.f32 0.5, %v2338
    %v2340 = vsub.f32 1.5, %v2339
    %v2341 = vmul.f32 %v2336, %v2340
    %vm2342 = vweird.f32 %v2325
    %vm2343 = vweird.f32 %v2336
    %vm2344 = vmor %vm2342, %vm2343
    %v2345 = vsel %vm2344, %v2336, %v2341
    %v2346 = vmul.f32 %v2312, %v2335
    %v2347 = vmul.f32 %v2313, %v2345
    %v2349 = vperm.slane %v2301, 0
    %v2351 = vmul.f32 %v2346, %v2349
    %v2352 = vmul.f32 %v2347, %v2349
    %v2354 = vperm.slane %v2303, 0
    %v2356 = vadd.f32 %v2351, %v2354
    %v2357 = vadd.f32 %v2352, %v2354
    %v2358 = vpack.c.bf16 %v2357, %v2356
    %s2359 = scalar_lea.vmem %s11, 16
    %v2360 = vld [vmem:[%s2359] sm:$0xf]
    %v2361 = vld [vmem:[%s2359 + $0x4] sm:$0xf]
    %v2362 = vld [vmem:[%s2359 + $0x8] sm:$0xf]
    %v2363 = vld [vmem:[%s2359 + $0xc] sm:$0xf]
    %s2364 = scalar_lea.vmem %s12, 1
    %v2365 = vld [vmem:[%s2364] sm:$0x1]
    %v2367 = vperm.slane %v2365, 0
    %v2373 = vunpack.c.l.b16 %v2360
    %v2374 = vunpack.c.l.b16 %v2361
    %v2375 = vunpack.c.l.b16 %v2362
    %v2376 = vunpack.c.l.b16 %v2363
    %v2377 = vpack.c.b16 %v2374, %v2373
    %v2378 = vpack.c.b16 %v2376, %v2375
    %v2382 = vsel %vm135, %v2358, 0
    %2384 = vmatpush.bf16.msra.mxu0 0
    %2385 = vmatpush.bf16.msra.mxu0 0
    %2386 = vmatpush.bf16.msra.mxu0 0
    %2387 = vmatpush.bf16.msra.mxu0 0
    %2388 = vmatpush.bf16.msra.mxu0 0
    %2389 = vmatpush.bf16.msra.mxu0 0
    %2390 = vmatpush.bf16.msra.mxu0 %v2378
    %2391 = vmatpush.bf16.msra.mxu0 %v2377
    %2392 = vmatmul.bf16.gmra.mxu0 %v2382
    %v2393 = vpop.f32.mrf.mxu0
    %v2394 = vadd.f32 %v2367, %v2393
    %v2395 = vpop.f32.mrf.mxu0
    %v2396 = vadd.f32 %v2367, %v2395
    %2397 = vdwg.mxu0
    %v2398 = vmul.f32 %v2394, 0.5
    %v2399 = vmul.f32 %v2396, 0.5
    %v2400 = vmul.f32 %v2394, 0.044715
    %v2401 = vmul.f32 %v2396, 0.044715
    %v2402 = vmul.f32 %v2400, %v2394
    %v2403 = vmul.f32 %v2401, %v2396
    %v2404 = vmul.f32 %v2402, %v2394
    %v2405 = vmul.f32 %v2403, %v2396
    %v2406 = vadd.f32 %v2394, %v2404
    %v2407 = vadd.f32 %v2396, %v2405
    %v2408 = vmul.f32 %v2406, 0.7978846
    %v2409 = vmul.f32 %v2407, 0.7978846
    %v2410 = vtanh.pop %v2408
    %v2411 = vtanh.pop %v2409
    %v2412 = vadd.f32 %v2410, 1.0
    %v2413 = vadd.f32 %v2411, 1.0
    %v2414 = vmul.f32 %v2398, %v2412
    %v2415 = vmul.f32 %v2399, %v2413
    %v2416 = vpack.c.bf16 %v2415, %v2414
    %s2417 = scalar_lea.vmem %s13, 32
    %v2418 = vld [vmem:[%s2417] sm:$0xf]
    %v2419 = vld [vmem:[%s2417 + $0x4] sm:$0xf]
    %v2420 = vld [vmem:[%s2417 + $0x8] sm:$0xf]
    %v2421 = vld [vmem:[%s2417 + $0xc] sm:$0xf]
    %v2422 = vld [vmem:[%s2417 + $0x10] sm:$0xf]
    %v2423 = vld [vmem:[%s2417 + $0x14] sm:$0xf]
    %v2424 = vld [vmem:[%s2417 + $0x18] sm:$0xf]
    %v2425 = vld [vmem:[%s2417 + $0x1c] sm:$0xf]
    %s2426 = scalar_lea.vmem %s14, 1
    %v2427 = vld [vmem:[%s2426] sm:$0x1]
    %v2429 = vperm.slane %v2427, 0
    %v2439 = vunpack.c.l.b16 %v2418
    %v2440 = vunpack.c.l.b16 %v2419
    %v2441 = vunpack.c.l.b16 %v2420
    %v2442 = vunpack.c.l.b16 %v2421
    %v2443 = vunpack.c.l.b16 %v2422
    %v2444 = vunpack.c.l.b16 %v2423
    %v2445 = vunpack.c.l.b16 %v2424
    %v2446 = vunpack.c.l.b16 %v2425
    %v2447 = vpack.c.b16 %v2440, %v2439
    %v2448 = vpack.c.b16 %v2442, %v2441
    %v2449 = vpack.c.b16 %v2444, %v2443
    %v2450 = vpack.c.b16 %v2446, %v2445
    %v2456 = vsel %vm1520, %v2416, 0
    %2458 = vmatpush.bf16.msra.mxu0 0
    %2459 = vmatpush.bf16.msra.mxu0 0
    %2460 = vmatpush.bf16.msra.mxu0 0
    %2461 = vmatpush.bf16.msra.mxu0 0
    %2462 = vmatpush.bf16.msra.mxu0 %v2450
    %2463 = vmatpush.bf16.msra.mxu0 %v2449
    %2464 = vmatpush.bf16.msra.mxu0 %v2448
    %2465 = vmatpush.bf16.msra.mxu0 %v2447
    %2466 = vmatmul.bf16.gmra.mxu0 %v2456
    %v2467 = vpop.f32.mrf.mxu0
    %v2468 = vadd.f32 %v2429, %v2467
    %v2469 = vpop.f32.mrf.mxu0
    %v2470 = vadd.f32 %v2429, %v2469
    %2471 = vdwg.mxu0
    %v2472 = vadd.f32 %v2468, %v2356
    %v2473 = vadd.f32 %v2470, %v2357
    %s2474 = scalar_lea.vmem [#allocation7], 1
    %v2475 = vld [vmem:[%s2474] sm:$0x1]
    %s2476 = scalar_lea.vmem %s16, 1
    %v2477 = vld [vmem:[%s2476] sm:$0x1]
    %v2478 = vsel %vm135, %v2472, 0.0
    %2479 = vadd.xlane.f32.xlu0 %v2478
    %v2480 = vpop.xlane.xlu0 %2479
    %v2481 = vsel %vm135, %v2473, 0.0
    %2482 = vadd.xlane.f32.xlu0 %v2481
    %v2483 = vpop.xlane.xlu0 %2482
    %v2484 = vmul.f32 %v2480, %v1308
    %v2485 = vmul.f32 %v2483, %v1308
    %v2486 = vsub.f32 %v2472, %v2484
    %v2487 = vsub.f32 %v2473, %v2485
    %v2488 = vmul.f32 %v2486, %v2486
    %v2489 = vmul.f32 %v2487, %v2487
    %v2490 = vsel %vm135, %v2488, 0.0
    %2491 = vadd.xlane.f32.xlu0 %v2490
    %v2492 = vpop.xlane.xlu0 %2491
    %v2493 = vsel %vm135, %v2489, 0.0
    %2494 = vadd.xlane.f32.xlu0 %v2493
    %v2495 = vpop.xlane.xlu0 %2494
    %v2496 = vmul.f32 %v2492, %v1308
    %v2497 = vmul.f32 %v2495, %v1308
    %v2498 = vadd.f32 %v2496, 1e-12
    %v2499 = vadd.f32 %v2497, 1e-12
    %v2500 = vrsqrt.pop %v2498
    %v2501 = vmul.f32 %v2500, %v2498
    %v2502 = vmul.f32 %v2501, %v2500
    %v2503 = vmul.f32 0.5, %v2502
    %v2504 = vsub.f32 1.5, %v2503
    %v2505 = vmul.f32 %v2500, %v2504
    %vm2506 = vweird.f32 %v2498
    %vm2507 = vweird.f32 %v2500
    %vm2508 = vmor %vm2506, %vm2507
    %v2509 = vsel %vm2508, %v2500, %v2505
    %v2510 = vrsqrt.pop %v2499
    %v2511 = vmul.f32 %v2510, %v2499
    %v2512 = vmul.f32 %v2511, %v2510
    %v2513 = vmul.f32 0.5, %v2512
    %v2514 = vsub.f32 1.5, %v2513
    %v2515 = vmul.f32 %v2510, %v2514
    %vm2516 = vweird.f32 %v2499
    %vm2517 = vweird.f32 %v2510
    %vm2518 = vmor %vm2516, %vm2517
    %v2519 = vsel %vm2518, %v2510, %v2515
    %v2520 = vmul.f32 %v2486, %v2509
    %v2521 = vmul.f32 %v2487, %v2519
    %v2523 = vperm.slane %v2475, 0
    %v2525 = vmul.f32 %v2520, %v2523
    %v2526 = vmul.f32 %v2521, %v2523
    %v2528 = vperm.slane %v2477, 0
    %v2530 = vadd.f32 %v2525, %v2528
    %v2531 = vadd.f32 %v2526, %v2528
    %2532 = vst.msk [vmem:[#allocation8] sm:$0xff] %vm135, %v2530
    %2533 = vst.msk [vmem:[#allocation8 + $0x8] sm:$0xff] %vm135, %v2531
    // Predicated region
    $region82: #{tpu_custom_call.1} parent=1 // pred_check
      _
    $region83: #{tpu_custom_call.1} parent=1 // pred_check_branch
      %2535 = sbr.rel (0) target = $region85
    $region84: #{tpu_custom_call.1} parent=1 // pred_region
      %2537 = vsyncadd [#allocation4], 0
      %s2538 = sshll.u32 [#allocation8], 4
      %s2539 = int_to_ptr.vmem [resolvable:$true] %s2538
      %s2540 = sshll.u32 %s17, 4
      %s2541 = int_to_ptr.hbm [resolvable:$true] %s2540
      %2546 = dma.vmem_to_hbm [thread:$0]  %s2539, 256, %s2541, [#allocation4], 128, 128, 8
    $region85: #{tpu_custom_call.1} parent=1 // pred_fallthru
      _
    // Predicated region
    $region86: #{tpu_custom_call.1} parent=1 // pred_check
      _
    $region87: #{tpu_custom_call.1} parent=1 // pred_check_branch
      %2548 = sbr.rel (0) target = $region89
    $region88: #{tpu_custom_call.1} parent=1 // pred_region
      %2550 = dma.done [#allocation4], 256
    $region89: #{tpu_custom_call.1} parent=1 // pred_fallthru
      _
    %2551 = vsyncpa [#allocation3], 1
    %2552 = vsyncpa [#allocation6], 1
    %2553 = vsyncpa [#allocation4], 1

</llo_original>
